<compile_context>
chip_gen: v5e
topology: v5e:2x2
jax: 0.10.0
libtpu: 0.0.40
codegen_flags: <defaults>
</compile_context>

<pallas_src>
import functools

import jax
import jax.numpy as jnp
from jax.experimental import pallas as pl
from jax.experimental.pallas import tpu as pltpu


def _round_up(n, m):
    return ((n + m - 1) // m) * m


def regression_net_kernel(
    x_ref,
    w1_ref, b1_ref,
    w2_ref, b2_ref,
    w3_ref, b3_ref,
    wh_ref, bh_ref,
    out_ref,
    *, outputs,
):
    """One batch tile of the full forward pass (weights resident in VMEM)."""
    x = x_ref[...]  # (TB, F) bf16

    # h1: Linear(F, 1024) + Sigmoid   (Dropout = identity at inference)
    h = jnp.dot(x, w1_ref[...], preferred_element_type=jnp.float32) + b1_ref[...]
    h = jax.nn.sigmoid(h).astype(jnp.bfloat16)

    # h2: Linear(1024, 512) + Sigmoid
    h = jnp.dot(h, w2_ref[...], preferred_element_type=jnp.float32) + b2_ref[...]
    h = jax.nn.sigmoid(h).astype(jnp.bfloat16)

    # h3: Linear(512, 128) + Sigmoid
    h = jnp.dot(h, w3_ref[...], preferred_element_type=jnp.float32) + b3_ref[...]
    h = jax.nn.sigmoid(h).astype(jnp.bfloat16)

    # Fused heads: columns [0, outputs) = mu, [outputs, 2*outputs) = log_var,
    # remaining columns are zero padding (lane-dense single matmul + store).
    head = jnp.dot(h, wh_ref[...], preferred_element_type=jnp.float32) + bh_ref[...]
    col = jax.lax.broadcasted_iota(jnp.int32, head.shape, 1)
    is_var = (col >= outputs) & (col < 2 * outputs)
    # exp goes to the EUP slot (essentially free); the select is a VPU op.
    out_ref[...] = jnp.where(is_var, jnp.exp(head), head).astype(out_ref.dtype)


def regression_net_forward(x, params):
    """x: (B, F) float32. params: dict of f32 weights/biases. Returns (mu, var)."""
    B, F = x.shape
    outputs = params["wr"].shape[1]
    head_pad = max(128, _round_up(2 * outputs, 128))  # lane-dense output slab

    # Batch tile: large (up to 512, multiple of the MXU height) for big
    # batches to amortize per-grid-step overhead, minimal sublane-aligned
    # tile otherwise.  Double-buffered it stays well under the VMEM budget.
    if B >= 512:
        TB = 512
    elif B >= 256:
        TB = 256
    else:
        TB = _round_up(B, 8)
    B_pad = _round_up(B, TB)

    x_p = x if B_pad == B else jnp.pad(x, ((0, B_pad - B), (0, 0)))
    x_bf = x_p.astype(jnp.bfloat16)

    # bf16 weight streaming; biases stay f32 (tiny, added to f32 accumulators).
    w1 = params["w1"].astype(jnp.bfloat16)
    w2 = params["w2"].astype(jnp.bfloat16)
    w3 = params["w3"].astype(jnp.bfloat16)
    b1 = params["b1"].astype(jnp.float32)
    b2 = params["b2"].astype(jnp.float32)
    b3 = params["b3"].astype(jnp.float32)

    # Fuse + pad the two heads into one (128, head_pad) matrix.
    wh = jnp.concatenate([params["wr"], params["wv"]], axis=1)
    wh = jnp.pad(wh, ((0, 0), (0, head_pad - 2 * outputs))).astype(jnp.bfloat16)
    bh = jnp.concatenate([params["br"], params["bv"]], axis=1)
    bh = jnp.pad(bh, ((0, 0), (0, head_pad - 2 * outputs))).astype(jnp.float32)

    grid = (B_pad // TB,)

    out = pl.pallas_call(
        functools.partial(regression_net_kernel, outputs=outputs),
        out_shape=jax.ShapeDtypeStruct((B_pad, head_pad), jnp.float32),
        grid=grid,
        in_specs=[
            pl.BlockSpec((TB, F), lambda i: (i, 0)),            # x: tiled over batch
            pl.BlockSpec((F, 1024), lambda i: (0, 0)),          # weights resident
            pl.BlockSpec((1, 1024), lambda i: (0, 0)),
            pl.BlockSpec((1024, 512), lambda i: (0, 0)),
            pl.BlockSpec((1, 512), lambda i: (0, 0)),
            pl.BlockSpec((512, 128), lambda i: (0, 0)),
            pl.BlockSpec((1, 128), lambda i: (0, 0)),
            pl.BlockSpec((128, head_pad), lambda i: (0, 0)),
            pl.BlockSpec((1, head_pad), lambda i: (0, 0)),
        ],
        out_specs=pl.BlockSpec((TB, head_pad), lambda i: (i, 0)),
        compiler_params=pltpu.CompilerParams(
            dimension_semantics=("parallel",),
            vmem_limit_bytes=16 << 20,
        ),
    )(x_bf, w1, b1, w2, b2, w3, b3, wh, bh)

    mu = out[:B, :outputs]
    var = out[:B, outputs:2 * outputs]
    return mu, var


def init_params(key, feature_count, outputs):
    """Deterministic synthetic parameter init (PyTorch-like uniform fan-in)."""
    def linear(k, fan_in, fan_out):
        kw, kb = jax.random.split(k)
        bound = 1.0 / jnp.sqrt(fan_in)
        w = jax.random.uniform(kw, (fan_in, fan_out), jnp.float32, -bound, bound)
        b = jax.random.uniform(kb, (1, fan_out), jnp.float32, -bound, bound)
        return w, b

    k1, k2, k3, k4, k5 = jax.random.split(key, 5)
    w1, b1 = linear(k1, feature_count, 1024)
    w2, b2 = linear(k2, 1024, 512)
    w3, b3 = linear(k3, 512, 128)
    wr, br = linear(k4, 128, outputs)
    wv, bv = linear(k5, 128, outputs)
    return dict(w1=w1, b1=b1, w2=w2, b2=b2, w3=w3, b3=b3,
                wr=wr, br=br, wv=wv, bv=bv)


if __name__ == "__main__":
    key = jax.random.PRNGKey(0)
    k_params, k_x = jax.random.split(key)

    feature_count = 32
    outputs = 2
    batch = 8

    params = init_params(k_params, feature_count, outputs)
    x = jax.random.normal(k_x, (batch, feature_count), dtype=jnp.float32)

    mu, var = regression_net_forward(x, params)
    jax.block_until_ready((mu, var))

    # Reference check in plain JAX (f32, dropout = identity). bf16 weight
    # streaming inside the kernel -> loosened tolerance (~1e-2 level).
    h = jax.nn.sigmoid(x @ params["w1"] + params["b1"])
    h = jax.nn.sigmoid(h @ params["w2"] + params["b2"])
    h = jax.nn.sigmoid(h @ params["w3"] + params["b3"])
    mu_ref = h @ params["wr"] + params["br"]
    var_ref = jnp.exp(h @ params["wv"] + params["bv"])

    assert mu.shape == (batch, outputs) and var.shape == (batch, outputs)
    assert jnp.allclose(mu, mu_ref, atol=2e-2, rtol=2e-2), (
        f"mu mismatch: max abs err {jnp.max(jnp.abs(mu - mu_ref))}")
    assert jnp.allclose(var, var_ref, atol=2e-2, rtol=2e-2), (
        f"var mismatch: max abs err {jnp.max(jnp.abs(var - var_ref))}")
    assert bool(jnp.all(var > 0))

    print("KERNEL_OK")
</pallas_src>

<mosaic_0001>
module attributes {stable_mosaic.version = 11 : i64} {
  func.func @regression_net_kernel(%arg0: i32, %arg1: memref<8x32xbf16, #tpu.memory_space<vmem>>, %arg2: memref<32x1024xbf16, #tpu.memory_space<vmem>>, %arg3: memref<1x1024xf32, #tpu.memory_space<vmem>>, %arg4: memref<1024x512xbf16, #tpu.memory_space<vmem>>, %arg5: memref<1x512xf32, #tpu.memory_space<vmem>>, %arg6: memref<512x128xbf16, #tpu.memory_space<vmem>>, %arg7: memref<1x128xf32, #tpu.memory_space<vmem>>, %arg8: memref<128x128xbf16, #tpu.memory_space<vmem>>, %arg9: memref<1x128xf32, #tpu.memory_space<vmem>>, %arg10: memref<8x128xf32, #tpu.memory_space<vmem>>) attributes {dimension_semantics = [#tpu.dimension_semantics<parallel>], iteration_bounds = array<i64: 1>, scalar_prefetch = 0 : i64, scratch_operands = 0 : i64, tpu.core_type = #tpu.core_type<tc>, window_params = [{transform_indices = @transform_0, window_bounds = array<i64: 8, 32>}, {pipeline_mode = #tpu.pipeline_mode<synchronous>, transform_indices = @transform_1, window_bounds = array<i64: 32, 1024>}, {pipeline_mode = #tpu.pipeline_mode<synchronous>, transform_indices = @transform_2, window_bounds = array<i64: 1, 1024>}, {pipeline_mode = #tpu.pipeline_mode<synchronous>, transform_indices = @transform_3, window_bounds = array<i64: 1024, 512>}, {pipeline_mode = #tpu.pipeline_mode<synchronous>, transform_indices = @transform_4, window_bounds = array<i64: 1, 512>}, {pipeline_mode = #tpu.pipeline_mode<synchronous>, transform_indices = @transform_5, window_bounds = array<i64: 512, 128>}, {pipeline_mode = #tpu.pipeline_mode<synchronous>, transform_indices = @transform_6, window_bounds = array<i64: 1, 128>}, {pipeline_mode = #tpu.pipeline_mode<synchronous>, transform_indices = @transform_7, window_bounds = array<i64: 128, 128>}, {pipeline_mode = #tpu.pipeline_mode<synchronous>, transform_indices = @transform_8, window_bounds = array<i64: 1, 128>}, {transform_indices = @transform_9, window_bounds = array<i64: 8, 128>}]} {
    %c0 = arith.constant 0 : index
    %c0_0 = arith.constant 0 : index
    %0 = vector.load %arg1[%c0, %c0_0] : memref<8x32xbf16, #tpu.memory_space<vmem>>, vector<8x32xbf16>
    %c0_1 = arith.constant 0 : index
    %c0_2 = arith.constant 0 : index
    %1 = vector.load %arg2[%c0_1, %c0_2] : memref<32x1024xbf16, #tpu.memory_space<vmem>>, vector<32x1024xbf16>
    %cst = arith.constant dense<0.000000e+00> : vector<8x1024xf32>
    %2 = tpu.matmul %0, %1, %cst {dimension_numbers = #tpu.dot_dimension_numbers<[1], [0], [0], [1], [0, 0, 1, 1], [], []>} : vector<8x32xbf16>, vector<32x1024xbf16>, vector<8x1024xf32> -> vector<8x1024xf32>
    %c0_3 = arith.constant 0 : index
    %c0_4 = arith.constant 0 : index
    %3 = vector.load %arg3[%c0_3, %c0_4] : memref<1x1024xf32, #tpu.memory_space<vmem>>, vector<1x1024xf32>
    %4 = vector.broadcast %3 : vector<1x1024xf32> to vector<8x1024xf32>
    %5 = arith.addf %2, %4 : vector<8x1024xf32>
    %6 = arith.negf %5 : vector<8x1024xf32>
    %7 = math.exp %6 : vector<8x1024xf32>
    %cst_5 = arith.constant 1.000000e+00 : f32
    %8 = vector.broadcast %cst_5 : f32 to vector<8x1024xf32>
    %9 = arith.addf %8, %7 : vector<8x1024xf32>
    %10 = arith.divf %8, %9 : vector<8x1024xf32>
    %11 = arith.truncf %10 : vector<8x1024xf32> to vector<8x1024xbf16>
    %c0_6 = arith.constant 0 : index
    %c0_7 = arith.constant 0 : index
    %12 = vector.load %arg4[%c0_6, %c0_7] : memref<1024x512xbf16, #tpu.memory_space<vmem>>, vector<1024x512xbf16>
    %cst_8 = arith.constant dense<0.000000e+00> : vector<8x512xf32>
    %13 = tpu.matmul %11, %12, %cst_8 {dimension_numbers = #tpu.dot_dimension_numbers<[1], [0], [0], [1], [0, 0, 1, 1], [], []>} : vector<8x1024xbf16>, vector<1024x512xbf16>, vector<8x512xf32> -> vector<8x512xf32>
    %c0_9 = arith.constant 0 : index
    %c0_10 = arith.constant 0 : index
    %14 = vector.load %arg5[%c0_9, %c0_10] : memref<1x512xf32, #tpu.memory_space<vmem>>, vector<1x512xf32>
    %15 = vector.broadcast %14 : vector<1x512xf32> to vector<8x512xf32>
    %16 = arith.addf %13, %15 : vector<8x512xf32>
    %17 = arith.negf %16 : vector<8x512xf32>
    %18 = math.exp %17 : vector<8x512xf32>
    %cst_11 = arith.constant 1.000000e+00 : f32
    %19 = vector.broadcast %cst_11 : f32 to vector<8x512xf32>
    %20 = arith.addf %19, %18 : vector<8x512xf32>
    %21 = arith.divf %19, %20 : vector<8x512xf32>
    %22 = arith.truncf %21 : vector<8x512xf32> to vector<8x512xbf16>
    %c0_12 = arith.constant 0 : index
    %c0_13 = arith.constant 0 : index
    %23 = vector.load %arg6[%c0_12, %c0_13] : memref<512x128xbf16, #tpu.memory_space<vmem>>, vector<512x128xbf16>
    %cst_14 = arith.constant dense<0.000000e+00> : vector<8x128xf32>
    %24 = tpu.matmul %22, %23, %cst_14 {dimension_numbers = #tpu.dot_dimension_numbers<[1], [0], [0], [1], [0, 0, 1, 1], [], []>} : vector<8x512xbf16>, vector<512x128xbf16>, vector<8x128xf32> -> vector<8x128xf32>
    %c0_15 = arith.constant 0 : index
    %c0_16 = arith.constant 0 : index
    %25 = vector.load %arg7[%c0_15, %c0_16] : memref<1x128xf32, #tpu.memory_space<vmem>>, vector<1x128xf32>
    %26 = vector.broadcast %25 : vector<1x128xf32> to vector<8x128xf32>
    %27 = arith.addf %24, %26 : vector<8x128xf32>
    %28 = arith.negf %27 : vector<8x128xf32>
    %29 = math.exp %28 : vector<8x128xf32>
    %cst_17 = arith.constant 1.000000e+00 : f32
    %30 = vector.broadcast %cst_17 : f32 to vector<8x128xf32>
    %31 = arith.addf %30, %29 : vector<8x128xf32>
    %32 = arith.divf %30, %31 : vector<8x128xf32>
    %33 = arith.truncf %32 : vector<8x128xf32> to vector<8x128xbf16>
    %c0_18 = arith.constant 0 : index
    %c0_19 = arith.constant 0 : index
    %34 = vector.load %arg8[%c0_18, %c0_19] : memref<128x128xbf16, #tpu.memory_space<vmem>>, vector<128x128xbf16>
    %cst_20 = arith.constant dense<0.000000e+00> : vector<8x128xf32>
    %35 = tpu.matmul %33, %34, %cst_20 {dimension_numbers = #tpu.dot_dimension_numbers<[1], [0], [0], [1], [0, 0, 1, 1], [], []>} : vector<8x128xbf16>, vector<128x128xbf16>, vector<8x128xf32> -> vector<8x128xf32>
    %c0_21 = arith.constant 0 : index
    %c0_22 = arith.constant 0 : index
    %36 = vector.load %arg9[%c0_21, %c0_22] : memref<1x128xf32, #tpu.memory_space<vmem>>, vector<1x128xf32>
    %37 = vector.broadcast %36 : vector<1x128xf32> to vector<8x128xf32>
    %38 = arith.addf %35, %37 : vector<8x128xf32>
    %39 = tpu.iota {dimensions = array<i32: 1>} : vector<8x128xi32>
    %c2_i32 = arith.constant 2 : i32
    %40 = vector.broadcast %c2_i32 : i32 to vector<8x128xi32>
    %41 = arith.cmpi sge, %39, %40 : vector<8x128xi32>
    %c4_i32 = arith.constant 4 : i32
    %42 = vector.broadcast %c4_i32 : i32 to vector<8x128xi32>
    %43 = arith.cmpi slt, %39, %42 : vector<8x128xi32>
    %44 = arith.andi %41, %43 : vector<8x128xi1>
    %45 = math.exp %38 : vector<8x128xf32>
    %46 = arith.select %44, %45, %38 : vector<8x128xi1>, vector<8x128xf32>
    %c0_23 = arith.constant 0 : index
    %c0_24 = arith.constant 0 : index
    %47 = vector.load %arg10[%c0_23, %c0_24] : memref<8x128xf32, #tpu.memory_space<vmem>>, vector<8x128xf32>
    tpu.vector_store %arg10[%c0_23, %c0_24], %46 {strides = array<i32>} : memref<8x128xf32, #tpu.memory_space<vmem>>, vector<8x128xf32>,
    return
  }
  func.func @transform_0(%arg0: i32) -> (i32, i32) {
    %c0_i32 = arith.constant 0 : i32
    %c0_i32_0 = arith.constant 0 : i32
    return %arg0, %c0_i32 : i32, i32
  }
  func.func @transform_1(%arg0: i32) -> (i32, i32) {
    %c0_i32 = arith.constant 0 : i32
    %c0_i32_0 = arith.constant 0 : i32
    %c0_i32_1 = arith.constant 0 : i32
    return %c0_i32, %c0_i32_0 : i32, i32
  }
  func.func @transform_2(%arg0: i32) -> (i32, i32) {
    %c0_i32 = arith.constant 0 : i32
    %c0_i32_0 = arith.constant 0 : i32
    %c0_i32_1 = arith.constant 0 : i32
    return %c0_i32, %c0_i32_0 : i32, i32
  }
  func.func @transform_3(%arg0: i32) -> (i32, i32) {
    %c0_i32 = arith.constant 0 : i32
    %c0_i32_0 = arith.constant 0 : i32
    %c0_i32_1 = arith.constant 0 : i32
    return %c0_i32, %c0_i32_0 : i32, i32
  }
  func.func @transform_4(%arg0: i32) -> (i32, i32) {
    %c0_i32 = arith.constant 0 : i32
    %c0_i32_0 = arith.constant 0 : i32
    %c0_i32_1 = arith.constant 0 : i32
    return %c0_i32, %c0_i32_0 : i32, i32
  }
  func.func @transform_5(%arg0: i32) -> (i32, i32) {
    %c0_i32 = arith.constant 0 : i32
    %c0_i32_0 = arith.constant 0 : i32
    %c0_i32_1 = arith.constant 0 : i32
    return %c0_i32, %c0_i32_0 : i32, i32
  }
  func.func @transform_6(%arg0: i32) -> (i32, i32) {
    %c0_i32 = arith.constant 0 : i32
    %c0_i32_0 = arith.constant 0 : i32
    %c0_i32_1 = arith.constant 0 : i32
    return %c0_i32, %c0_i32_0 : i32, i32
  }
  func.func @transform_7(%arg0: i32) -> (i32, i32) {
    %c0_i32 = arith.constant 0 : i32
    %c0_i32_0 = arith.constant 0 : i32
    %c0_i32_1 = arith.constant 0 : i32
    return %c0_i32, %c0_i32_0 : i32, i32
  }
  func.func @transform_8(%arg0: i32) -> (i32, i32) {
    %c0_i32 = arith.constant 0 : i32
    %c0_i32_0 = arith.constant 0 : i32
    %c0_i32_1 = arith.constant 0 : i32
    return %c0_i32, %c0_i32_0 : i32, i32
  }
  func.func @transform_9(%arg0: i32) -> (i32, i32) {
    %c0_i32 = arith.constant 0 : i32
    %c0_i32_0 = arith.constant 0 : i32
    return %arg0, %c0_i32 : i32, i32
  }
}

</mosaic_0001>

<llo_original>
// kernel: tpu_custom_call.1
$region0: #{tpu_custom_call.1}
  #allocation0 [shape = 'u32[]', space=smem, size = 0x4, offset = 0x4, fixed_abs, tag = 'smem constant byte address 0x4 - core index']
  #allocation1 [shape = 'u32[72,128]{1,0:T(1,128)}', space=vmem, size = 0x9000, scoped, tag = 'internal scratch']
  %s0 = inlined_call_operand.hbm [shape: bf16[8,32], index: 0, kind: input, shape index: {}]
  %s1 = inlined_call_operand.hbm [shape: bf16[32,1024], index: 1, kind: input, shape index: {}]
  %s2 = inlined_call_operand.hbm [shape: f32[1,1024], index: 2, kind: input, shape index: {}]
  %s3 = inlined_call_operand.hbm [shape: bf16[1024,512], index: 3, kind: input, shape index: {}]
  %s4 = inlined_call_operand.hbm [shape: f32[1,512], index: 4, kind: input, shape index: {}]
  %s5 = inlined_call_operand.hbm [shape: bf16[512,128], index: 5, kind: input, shape index: {}]
  %s6 = inlined_call_operand.vmem [shape: f32[1,128], index: 6, kind: input, shape index: {}]
  %s7 = inlined_call_operand.hbm [shape: bf16[128,128], index: 7, kind: input, shape index: {}]
  %s8 = inlined_call_operand.vmem [shape: f32[1,128], index: 8, kind: input, shape index: {}]
  %s9 = inlined_call_operand.hbm [shape: f32[8,128], index: 9, kind: output, shape index: {}]
  %s10 = sld [smem:[#allocation0]]
  $region74: #{tpu_custom_call.1} parent=0
    _
  %s12 = ssub.s32 1, %s10
  %s13 = scalar_select 0, %s12, %s10
  $region1: #{tpu_custom_call.1} parent=0
    #allocation2 [shape = 'u8[2048]{0}', space=vmem, size = 0x800, scoped, tag = 'input window, operand 0, single buffered']
    #allocation3 [shape = 's32[1]{0}', space=sflag, size = 0x4, scoped, tag = 'scoped memory for tpu_custom_call.1']
    #allocation4 [shape = 's32[1]{0}', space=sflag, size = 0x4, scoped, tag = 'scoped memory for tpu_custom_call.1']
    #allocation5 [shape = 'u8[65536]{0}', space=vmem, size = 0x10000, scoped, tag = 'input window, operand 1, single buffered']
    #allocation6 [shape = 's32[1]{0}', space=sflag, size = 0x4, scoped, tag = 'scoped memory for tpu_custom_call.1']
    #allocation7 [shape = 'u8[4096]{0}', space=vmem, size = 0x1000, scoped, tag = 'input window, operand 2, single buffered']
    #allocation8 [shape = 'u8[1048576]{0}', space=vmem, size = 0x100000, scoped, tag = 'input window, operand 3, single buffered']
    #allocation9 [shape = 's32[1]{0}', space=sflag, size = 0x4, scoped, tag = 'scoped memory for tpu_custom_call.1']
    #allocation10 [shape = 'u8[2048]{0}', space=vmem, size = 0x800, scoped, tag = 'input window, operand 4, single buffered']
    #allocation11 [shape = 'u8[131072]{0}', space=vmem, size = 0x20000, scoped, tag = 'input window, operand 5, single buffered']
    #allocation12 [shape = 's32[1]{0}', space=sflag, size = 0x4, scoped, tag = 'scoped memory for tpu_custom_call.1']
    #allocation13 [shape = 'u8[32768]{0}', space=vmem, size = 0x8000, scoped, tag = 'input window, operand 7, single buffered']
    #allocation14 [shape = 'u8[4096]{0}', space=vmem, size = 0x1000, scoped, tag = 'output window, operand 0, single buffered']
    %14 = vsyncpa [#allocation3], 0
    %15 = vsyncpa [#allocation6], 0
    %16 = vsyncpa [#allocation9], 0
    %17 = vsyncpa [#allocation12], 0
    %18 = vsyncpa [#allocation4], 0
    // Predicated region
    $region2: #{tpu_custom_call.1} parent=1 // pred_check
      _
    $region3: #{tpu_custom_call.1} parent=1 // pred_check_branch
      %20 = sbr.rel (0) target = $region5
    $region4: #{tpu_custom_call.1} parent=1 // pred_region
      %22 = vsyncadd [#allocation3], 0
      %s24 = sshll.u32 %s0, 4
      %s25 = int_to_ptr.hbm [resolvable:$true] %s24
      %s26 = sshll.u32 [#allocation2], 4
      %s27 = int_to_ptr.vmem [resolvable:$true] %s26
      %29 = dma.hbm_to_vmem [thread:$0]  %s25, 64, %s27, [#allocation3]
    $region5: #{tpu_custom_call.1} parent=1 // pred_fallthru
      _
    // Predicated region
    $region6: #{tpu_custom_call.1} parent=1 // pred_check
      _
    $region7: #{tpu_custom_call.1} parent=1 // pred_check_branch
      %31 = sbr.rel (0) target = $region9
    $region8: #{tpu_custom_call.1} parent=1 // pred_region
      %33 = vsyncadd [#allocation6], 0
      %s34 = sshll.u32 %s1, 4
      %s35 = int_to_ptr.hbm [resolvable:$true] %s34
      %s36 = sshll.u32 [#allocation5], 4
      %s37 = int_to_ptr.vmem [resolvable:$true] %s36
      %42 = dma.hbm_to_vmem [thread:$0]  %s35, 2048, %s37, [#allocation6], 512, 512, 32
    $region9: #{tpu_custom_call.1} parent=1 // pred_fallthru
      _
    // Predicated region
    $region10: #{tpu_custom_call.1} parent=1 // pred_check
      _
    $region11: #{tpu_custom_call.1} parent=1 // pred_check_branch
      %44 = sbr.rel (0) target = $region13
    $region12: #{tpu_custom_call.1} parent=1 // pred_region
      %46 = vsyncadd [#allocation6], 0
      %s48 = sshll.u32 %s2, 4
      %s49 = int_to_ptr.hbm [resolvable:$true] %s48
      %s50 = sshll.u32 [#allocation7], 4
      %s51 = int_to_ptr.vmem [resolvable:$true] %s50
      %53 = dma.hbm_to_vmem [thread:$0]  %s49, 128, %s51, [#allocation6]
    $region13: #{tpu_custom_call.1} parent=1 // pred_fallthru
      _
    // Predicated region
    $region14: #{tpu_custom_call.1} parent=1 // pred_check
      _
    $region15: #{tpu_custom_call.1} parent=1 // pred_check_branch
      %55 = sbr.rel (0) target = $region17
    $region16: #{tpu_custom_call.1} parent=1 // pred_region
      %57 = vsyncadd [#allocation9], 0
      %s58 = sshll.u32 %s3, 4
      %s59 = int_to_ptr.hbm [resolvable:$true] %s58
      %s60 = sshll.u32 [#allocation8], 4
      %s61 = int_to_ptr.vmem [resolvable:$true] %s60
      %66 = dma.hbm_to_vmem [thread:$0]  %s59, 32768, %s61, [#allocation9], 256, 256, 16
    $region17: #{tpu_custom_call.1} parent=1 // pred_fallthru
      _
    // Predicated region
    $region18: #{tpu_custom_call.1} parent=1 // pred_check
      _
    $region19: #{tpu_custom_call.1} parent=1 // pred_check_branch
      %68 = sbr.rel (0) target = $region21
    $region20: #{tpu_custom_call.1} parent=1 // pred_region
      %70 = vsyncadd [#allocation9], 0
      %s72 = sshll.u32 %s4, 4
      %s73 = int_to_ptr.hbm [resolvable:$true] %s72
      %s74 = sshll.u32 [#allocation10], 4
      %s75 = int_to_ptr.vmem [resolvable:$true] %s74
      %77 = dma.hbm_to_vmem [thread:$0]  %s73, 64, %s75, [#allocation9]
    $region21: #{tpu_custom_call.1} parent=1 // pred_fallthru
      _
    // Predicated region
    $region22: #{tpu_custom_call.1} parent=1 // pred_check
      _
    $region23: #{tpu_custom_call.1} parent=1 // pred_check_branch
      %79 = sbr.rel (0) target = $region25
    $region24: #{tpu_custom_call.1} parent=1 // pred_region
      %81 = vsyncadd [#allocation12], 0
      %s82 = sshll.u32 %s5, 4
      %s83 = int_to_ptr.hbm [resolvable:$true] %s82
      %s84 = sshll.u32 [#allocation11], 4
      %s85 = int_to_ptr.vmem [resolvable:$true] %s84
      %90 = dma.hbm_to_vmem [thread:$0]  %s83, 4096, %s85, [#allocation12], 64, 64, 4
    $region25: #{tpu_custom_call.1} parent=1 // pred_fallthru
      _
    // Predicated region
    $region26: #{tpu_custom_call.1} parent=1 // pred_check
      _
    $region27: #{tpu_custom_call.1} parent=1 // pred_check_branch
      %92 = sbr.rel (0) target = $region29
    $region28: #{tpu_custom_call.1} parent=1 // pred_region
      _
    $region29: #{tpu_custom_call.1} parent=1 // pred_fallthru
      _
    // Predicated region
    $region30: #{tpu_custom_call.1} parent=1 // pred_check
      _
    $region31: #{tpu_custom_call.1} parent=1 // pred_check_branch
      %94 = sbr.rel (0) target = $region33
    $region32: #{tpu_custom_call.1} parent=1 // pred_region
      %96 = vsyncadd [#allocation12], 0
      %s97 = sshll.u32 %s7, 4
      %s98 = int_to_ptr.hbm [resolvable:$true] %s97
      %s99 = sshll.u32 [#allocation13], 4
      %s100 = int_to_ptr.vmem [resolvable:$true] %s99
      %105 = dma.hbm_to_vmem [thread:$0]  %s98, 1024, %s100, [#allocation12], 64, 64, 4
    $region33: #{tpu_custom_call.1} parent=1 // pred_fallthru
      _
    // Predicated region
    $region34: #{tpu_custom_call.1} parent=1 // pred_check
      _
    $region35: #{tpu_custom_call.1} parent=1 // pred_check_branch
      %107 = sbr.rel (0) target = $region37
    $region36: #{tpu_custom_call.1} parent=1 // pred_region
      _
    $region37: #{tpu_custom_call.1} parent=1 // pred_fallthru
      _
    // Predicated region
    $region38: #{tpu_custom_call.1} parent=1 // pred_check
      _
    $region39: #{tpu_custom_call.1} parent=1 // pred_check_branch
      %109 = sbr.rel (0) target = $region41
    $region40: #{tpu_custom_call.1} parent=1 // pred_region
      %111 = dma.done [#allocation3], 64
    $region41: #{tpu_custom_call.1} parent=1 // pred_fallthru
      _
    // Predicated region
    $region42: #{tpu_custom_call.1} parent=1 // pred_check
      _
    $region43: #{tpu_custom_call.1} parent=1 // pred_check_branch
      %113 = sbr.rel (0) target = $region45
    $region44: #{tpu_custom_call.1} parent=1 // pred_region
      %115 = dma.done [#allocation6], 2048
    $region45: #{tpu_custom_call.1} parent=1 // pred_fallthru
      _
    // Predicated region
    $region46: #{tpu_custom_call.1} parent=1 // pred_check
      _
    $region47: #{tpu_custom_call.1} parent=1 // pred_check_branch
      %117 = sbr.rel (0) target = $region49
    $region48: #{tpu_custom_call.1} parent=1 // pred_region
      %119 = dma.done [#allocation6], 128
    $region49: #{tpu_custom_call.1} parent=1 // pred_fallthru
      _
    // Predicated region
    $region50: #{tpu_custom_call.1} parent=1 // pred_check
      _
    $region51: #{tpu_custom_call.1} parent=1 // pred_check_branch
      %121 = sbr.rel (0) target = $region53
    $region52: #{tpu_custom_call.1} parent=1 // pred_region
      %123 = dma.done [#allocation9], 32768
    $region53: #{tpu_custom_call.1} parent=1 // pred_fallthru
      _
    // Predicated region
    $region54: #{tpu_custom_call.1} parent=1 // pred_check
      _
    $region55: #{tpu_custom_call.1} parent=1 // pred_check_branch
      %125 = sbr.rel (0) target = $region57
    $region56: #{tpu_custom_call.1} parent=1 // pred_region
      %127 = dma.done [#allocation9], 64
    $region57: #{tpu_custom_call.1} parent=1 // pred_fallthru
      _
    // Predicated region
    $region58: #{tpu_custom_call.1} parent=1 // pred_check
      _
    $region59: #{tpu_custom_call.1} parent=1 // pred_check_branch
      %129 = sbr.rel (0) target = $region61
    $region60: #{tpu_custom_call.1} parent=1 // pred_region
      %131 = dma.done [#allocation12], 4096
    $region61: #{tpu_custom_call.1} parent=1 // pred_fallthru
      _
    // Predicated region
    $region62: #{tpu_custom_call.1} parent=1 // pred_check
      _
    $region63: #{tpu_custom_call.1} parent=1 // pred_check_branch
      %133 = sbr.rel (0) target = $region65
    $region64: #{tpu_custom_call.1} parent=1 // pred_region
      %135 = dma.done [#allocation12], 1024
    $region65: #{tpu_custom_call.1} parent=1 // pred_fallthru
      _
    %v137 = vld [vmem:[#allocation2] sm:$0xf]
    %v138 = vld [vmem:[#allocation5] sm:$0xff]
    %v139 = vld [vmem:[#allocation5 + $0x8] sm:$0xff]
    %v140 = vld [vmem:[#allocation5 + $0x10] sm:$0xff]
    %v141 = vld [vmem:[#allocation5 + $0x18] sm:$0xff]
    %v142 = vld [vmem:[#allocation5 + $0x20] sm:$0xff]
    %v143 = vld [vmem:[#allocation5 + $0x28] sm:$0xff]
    %v144 = vld [vmem:[#allocation5 + $0x30] sm:$0xff]
    %v145 = vld [vmem:[#allocation5 + $0x38] sm:$0xff]
    %v146 = vld [vmem:[#allocation5 + $0x40] sm:$0xff]
    %v147 = vld [vmem:[#allocation5 + $0x48] sm:$0xff]
    %v148 = vld [vmem:[#allocation5 + $0x50] sm:$0xff]
    %v149 = vld [vmem:[#allocation5 + $0x58] sm:$0xff]
    %v150 = vld [vmem:[#allocation5 + $0x60] sm:$0xff]
    %v151 = vld [vmem:[#allocation5 + $0x68] sm:$0xff]
    %v152 = vld [vmem:[#allocation5 + $0x70] sm:$0xff]
    %v153 = vld [vmem:[#allocation5 + $0x78] sm:$0xff]
    %v154 = vld [vmem:[#allocation7] sm:$0xff]
    %v156 = vperm.slane %v154, 0
    %v157 = vperm.slane %v154, 1
    %v158 = vperm.slane %v154, 2
    %v159 = vperm.slane %v154, 3
    %v160 = vperm.slane %v154, 4
    %v161 = vperm.slane %v154, 5
    %v162 = vperm.slane %v154, 6
    %v163 = vperm.slane %v154, 7
    %v188 = vunpack.c.l.b16 %v138
    %v189 = vunpack.c.h.b16 %v138
    %v190 = vunpack.c.l.b16 %v139
    %v191 = vunpack.c.h.b16 %v139
    %v192 = vunpack.c.l.b16 %v140
    %v193 = vunpack.c.h.b16 %v140
    %v194 = vunpack.c.l.b16 %v141
    %v195 = vunpack.c.h.b16 %v141
    %v196 = vunpack.c.l.b16 %v142
    %v197 = vunpack.c.h.b16 %v142
    %v198 = vunpack.c.l.b16 %v143
    %v199 = vunpack.c.h.b16 %v143
    %v200 = vunpack.c.l.b16 %v144
    %v201 = vunpack.c.h.b16 %v144
    %v202 = vunpack.c.l.b16 %v145
    %v203 = vunpack.c.h.b16 %v145
    %v204 = vunpack.c.l.b16 %v146
    %v205 = vunpack.c.h.b16 %v146
    %v206 = vunpack.c.l.b16 %v147
    %v207 = vunpack.c.h.b16 %v147
    %v208 = vunpack.c.l.b16 %v148
    %v209 = vunpack.c.h.b16 %v148
    %v210 = vunpack.c.l.b16 %v149
    %v211 = vunpack.c.h.b16 %v149
    %v212 = vunpack.c.l.b16 %v150
    %v213 = vunpack.c.h.b16 %v150
    %v214 = vunpack.c.l.b16 %v151
    %v215 = vunpack.c.h.b16 %v151
    %v216 = vunpack.c.l.b16 %v152
    %v217 = vunpack.c.h.b16 %v152
    %v218 = vunpack.c.l.b16 %v153
    %v219 = vunpack.c.h.b16 %v153
    %v220 = vpack.c.b16 %v196, %v188
    %v221 = vpack.c.b16 %v197, %v189
    %v222 = vpack.c.b16 %v198, %v190
    %v223 = vpack.c.b16 %v199, %v191
    %v224 = vpack.c.b16 %v200, %v192
    %v225 = vpack.c.b16 %v201, %v193
    %v226 = vpack.c.b16 %v202, %v194
    %v227 = vpack.c.b16 %v203, %v195
    %v228 = vpack.c.b16 %v212, %v204
    %v229 = vpack.c.b16 %v213, %v205
    %v230 = vpack.c.b16 %v214, %v206
    %v231 = vpack.c.b16 %v215, %v207
    %v232 = vpack.c.b16 %v216, %v208
    %v233 = vpack.c.b16 %v217, %v209
    %v234 = vpack.c.b16 %v218, %v210
    %v235 = vpack.c.b16 %v219, %v211
    %vm252 = vcmask 261120
    %v254 = vsel %vm252, %v137, 0
    %256 = vmatpush.bf16.msra.mxu0 0
    %257 = vmatpush.bf16.msra.mxu0 0
    %258 = vmatpush.bf16.msra.mxu0 0
    %259 = vmatpush.bf16.msra.mxu0 0
    %260 = vmatpush.bf16.msra.mxu0 0
    %261 = vmatpush.bf16.msra.mxu0 0
    %262 = vmatpush.bf16.msra.mxu0 %v228
    %263 = vmatpush.bf16.msra.mxu0 %v220
    %264 = vmatmul.bf16.gmra.mxu0 %v254
    %v265 = vpop.f32.mrf.mxu0
    %v266 = vadd.f32 %v156, %v265
    %v267 = vpop.f32.mrf.mxu0
    %268 = vdwg.mxu0
    %269 = vmatpush.bf16.msra.mxu0 0
    %270 = vmatpush.bf16.msra.mxu0 0
    %271 = vmatpush.bf16.msra.mxu0 0
    %272 = vmatpush.bf16.msra.mxu0 0
    %273 = vmatpush.bf16.msra.mxu0 0
    %274 = vmatpush.bf16.msra.mxu0 0
    %275 = vmatpush.bf16.msra.mxu0 %v229
    %276 = vmatpush.bf16.msra.mxu0 %v221
    %277 = vmatmul.bf16.gmra.mxu0 %v254
    %v278 = vpop.f32.mrf.mxu0
    %v279 = vadd.f32 %v157, %v278
    %v280 = vpop.f32.mrf.mxu0
    %281 = vdwg.mxu0
    %282 = vmatpush.bf16.msra.mxu0 0
    %283 = vmatpush.bf16.msra.mxu0 0
    %284 = vmatpush.bf16.msra.mxu0 0
    %285 = vmatpush.bf16.msra.mxu0 0
    %286 = vmatpush.bf16.msra.mxu0 0
    %287 = vmatpush.bf16.msra.mxu0 0
    %288 = vmatpush.bf16.msra.mxu0 %v230
    %289 = vmatpush.bf16.msra.mxu0 %v222
    %290 = vmatmul.bf16.gmra.mxu0 %v254
    %v291 = vpop.f32.mrf.mxu0
    %v292 = vadd.f32 %v158, %v291
    %v293 = vpop.f32.mrf.mxu0
    %294 = vdwg.mxu0
    %295 = vmatpush.bf16.msra.mxu0 0
    %296 = vmatpush.bf16.msra.mxu0 0
    %297 = vmatpush.bf16.msra.mxu0 0
    %298 = vmatpush.bf16.msra.mxu0 0
    %299 = vmatpush.bf16.msra.mxu0 0
    %300 = vmatpush.bf16.msra.mxu0 0
    %301 = vmatpush.bf16.msra.mxu0 %v231
    %302 = vmatpush.bf16.msra.mxu0 %v223
    %303 = vmatmul.bf16.gmra.mxu0 %v254
    %v304 = vpop.f32.mrf.mxu0
    %v305 = vadd.f32 %v159, %v304
    %v306 = vpop.f32.mrf.mxu0
    %307 = vdwg.mxu0
    %308 = vmatpush.bf16.msra.mxu0 0
    %309 = vmatpush.bf16.msra.mxu0 0
    %310 = vmatpush.bf16.msra.mxu0 0
    %311 = vmatpush.bf16.msra.mxu0 0
    %312 = vmatpush.bf16.msra.mxu0 0
    %313 = vmatpush.bf16.msra.mxu0 0
    %314 = vmatpush.bf16.msra.mxu0 %v232
    %315 = vmatpush.bf16.msra.mxu0 %v224
    %316 = vmatmul.bf16.gmra.mxu0 %v254
    %v317 = vpop.f32.mrf.mxu0
    %v318 = vadd.f32 %v160, %v317
    %v319 = vpop.f32.mrf.mxu0
    %320 = vdwg.mxu0
    %321 = vmatpush.bf16.msra.mxu0 0
    %322 = vmatpush.bf16.msra.mxu0 0
    %323 = vmatpush.bf16.msra.mxu0 0
    %324 = vmatpush.bf16.msra.mxu0 0
    %325 = vmatpush.bf16.msra.mxu0 0
    %326 = vmatpush.bf16.msra.mxu0 0
    %327 = vmatpush.bf16.msra.mxu0 %v233
    %328 = vmatpush.bf16.msra.mxu0 %v225
    %329 = vmatmul.bf16.gmra.mxu0 %v254
    %v330 = vpop.f32.mrf.mxu0
    %v331 = vadd.f32 %v161, %v330
    %v332 = vpop.f32.mrf.mxu0
    %333 = vdwg.mxu0
    %334 = vmatpush.bf16.msra.mxu0 0
    %335 = vmatpush.bf16.msra.mxu0 0
    %336 = vmatpush.bf16.msra.mxu0 0
    %337 = vmatpush.bf16.msra.mxu0 0
    %338 = vmatpush.bf16.msra.mxu0 0
    %339 = vmatpush.bf16.msra.mxu0 0
    %340 = vmatpush.bf16.msra.mxu0 %v234
    %341 = vmatpush.bf16.msra.mxu0 %v226
    %342 = vmatmul.bf16.gmra.mxu0 %v254
    %v343 = vpop.f32.mrf.mxu0
    %v344 = vadd.f32 %v162, %v343
    %v345 = vpop.f32.mrf.mxu0
    %346 = vdwg.mxu0
    %347 = vmatpush.bf16.msra.mxu0 0
    %348 = vmatpush.bf16.msra.mxu0 0
    %349 = vmatpush.bf16.msra.mxu0 0
    %350 = vmatpush.bf16.msra.mxu0 0
    %351 = vmatpush.bf16.msra.mxu0 0
    %352 = vmatpush.bf16.msra.mxu0 0
    %353 = vmatpush.bf16.msra.mxu0 %v235
    %354 = vmatpush.bf16.msra.mxu0 %v227
    %355 = vmatmul.bf16.gmra.mxu0 %v254
    %v356 = vpop.f32.mrf.mxu0
    %v357 = vadd.f32 %v163, %v356
    %v358 = vpop.f32.mrf.mxu0
    %359 = vdwg.mxu0
    %v360 = vxor.u32 %v266, 2147483648
    %v361 = vxor.u32 %v279, 2147483648
    %v362 = vxor.u32 %v292, 2147483648
    %v363 = vxor.u32 %v305, 2147483648
    %v364 = vxor.u32 %v318, 2147483648
    %v365 = vxor.u32 %v331, 2147483648
    %v366 = vxor.u32 %v344, 2147483648
    %v367 = vxor.u32 %v357, 2147483648
    %v368 = vmul.f32 %v360, 1.442695
    %v369 = vpow.pop %v368
    %v370 = vmul.f32 %v361, 1.442695
    %v371 = vpow.pop %v370
    %v372 = vmul.f32 %v362, 1.442695
    %v373 = vpow.pop %v372
    %v374 = vmul.f32 %v363, 1.442695
    %v375 = vpow.pop %v374
    %v376 = vmul.f32 %v364, 1.442695
    %v377 = vpow.pop %v376
    %v378 = vmul.f32 %v365, 1.442695
    %v379 = vpow.pop %v378
    %v380 = vmul.f32 %v366, 1.442695
    %v381 = vpow.pop %v380
    %v382 = vmul.f32 %v367, 1.442695
    %v383 = vpow.pop %v382
    %v384 = vadd.f32 %v369, 1.0
    %v385 = vadd.f32 %v371, 1.0
    %v386 = vadd.f32 %v373, 1.0
    %v387 = vadd.f32 %v375, 1.0
    %v388 = vadd.f32 %v377, 1.0
    %v389 = vadd.f32 %v379, 1.0
    %v390 = vadd.f32 %v381, 1.0
    %v391 = vadd.f32 %v383, 1.0
    %v392 = vrcp.pop %v384
    %v393 = vmul.f32 %v384, %v392
    %v394 = vsub.f32 1.0, %v393
    %v395 = vmul.f32 %v392, %v394
    %v396 = vadd.f32 %v392, %v395
    %vm397 = vweird.f32 %v384
    %vm398 = vweird.f32 %v392
    %vm399 = vmor %vm397, %vm398
    %v400 = vsel %vm399, %v392, %v396
    %v401 = vand.u32 2147483647, %v384
    %vm402 = vcmp.eq.f32.partialorder %v401, 8.507059e+37
    %v403 = vand.u32 %v384, 2147483648
    %v404 = vor.u32 1.1754944e-38, %v403
    %v405 = vsel %vm402, %v404, %v400
    %v406 = vmul.f32 1.0, %v405
    %v407 = vrcp.pop %v385
    %v408 = vmul.f32 %v385, %v407
    %v409 = vsub.f32 1.0, %v408
    %v410 = vmul.f32 %v407, %v409
    %v411 = vadd.f32 %v407, %v410
    %vm412 = vweird.f32 %v385
    %vm413 = vweird.f32 %v407
    %vm414 = vmor %vm412, %vm413
    %v415 = vsel %vm414, %v407, %v411
    %v416 = vand.u32 2147483647, %v385
    %vm417 = vcmp.eq.f32.partialorder %v416, 8.507059e+37
    %v418 = vand.u32 %v385, 2147483648
    %v419 = vor.u32 1.1754944e-38, %v418
    %v420 = vsel %vm417, %v419, %v415
    %v421 = vmul.f32 1.0, %v420
    %v422 = vrcp.pop %v386
    %v423 = vmul.f32 %v386, %v422
    %v424 = vsub.f32 1.0, %v423
    %v425 = vmul.f32 %v422, %v424
    %v426 = vadd.f32 %v422, %v425
    %vm427 = vweird.f32 %v386
    %vm428 = vweird.f32 %v422
    %vm429 = vmor %vm427, %vm428
    %v430 = vsel %vm429, %v422, %v426
    %v431 = vand.u32 2147483647, %v386
    %vm432 = vcmp.eq.f32.partialorder %v431, 8.507059e+37
    %v433 = vand.u32 %v386, 2147483648
    %v434 = vor.u32 1.1754944e-38, %v433
    %v435 = vsel %vm432, %v434, %v430
    %v436 = vmul.f32 1.0, %v435
    %v437 = vrcp.pop %v387
    %v438 = vmul.f32 %v387, %v437
    %v439 = vsub.f32 1.0, %v438
    %v440 = vmul.f32 %v437, %v439
    %v441 = vadd.f32 %v437, %v440
    %vm442 = vweird.f32 %v387
    %vm443 = vweird.f32 %v437
    %vm444 = vmor %vm442, %vm443
    %v445 = vsel %vm444, %v437, %v441
    %v446 = vand.u32 2147483647, %v387
    %vm447 = vcmp.eq.f32.partialorder %v446, 8.507059e+37
    %v448 = vand.u32 %v387, 2147483648
    %v449 = vor.u32 1.1754944e-38, %v448
    %v450 = vsel %vm447, %v449, %v445
    %v451 = vmul.f32 1.0, %v450
    %v452 = vrcp.pop %v388
    %v453 = vmul.f32 %v388, %v452
    %v454 = vsub.f32 1.0, %v453
    %v455 = vmul.f32 %v452, %v454
    %v456 = vadd.f32 %v452, %v455
    %vm457 = vweird.f32 %v388
    %vm458 = vweird.f32 %v452
    %vm459 = vmor %vm457, %vm458
    %v460 = vsel %vm459, %v452, %v456
    %v461 = vand.u32 2147483647, %v388
    %vm462 = vcmp.eq.f32.partialorder %v461, 8.507059e+37
    %v463 = vand.u32 %v388, 2147483648
    %v464 = vor.u32 1.1754944e-38, %v463
    %v465 = vsel %vm462, %v464, %v460
    %v466 = vmul.f32 1.0, %v465
    %v467 = vrcp.pop %v389
    %v468 = vmul.f32 %v389, %v467
    %v469 = vsub.f32 1.0, %v468
    %v470 = vmul.f32 %v467, %v469
    %v471 = vadd.f32 %v467, %v470
    %vm472 = vweird.f32 %v389
    %vm473 = vweird.f32 %v467
    %vm474 = vmor %vm472, %vm473
    %v475 = vsel %vm474, %v467, %v471
    %v476 = vand.u32 2147483647, %v389
    %vm477 = vcmp.eq.f32.partialorder %v476, 8.507059e+37
    %v478 = vand.u32 %v389, 2147483648
    %v479 = vor.u32 1.1754944e-38, %v478
    %v480 = vsel %vm477, %v479, %v475
    %v481 = vmul.f32 1.0, %v480
    %v482 = vrcp.pop %v390
    %v483 = vmul.f32 %v390, %v482
    %v484 = vsub.f32 1.0, %v483
    %v485 = vmul.f32 %v482, %v484
    %v486 = vadd.f32 %v482, %v485
    %vm487 = vweird.f32 %v390
    %vm488 = vweird.f32 %v482
    %vm489 = vmor %vm487, %vm488
    %v490 = vsel %vm489, %v482, %v486
    %v491 = vand.u32 2147483647, %v390
    %vm492 = vcmp.eq.f32.partialorder %v491, 8.507059e+37
    %v493 = vand.u32 %v390, 2147483648
    %v494 = vor.u32 1.1754944e-38, %v493
    %v495 = vsel %vm492, %v494, %v490
    %v496 = vmul.f32 1.0, %v495
    %v497 = vrcp.pop %v391
    %v498 = vmul.f32 %v391, %v497
    %v499 = vsub.f32 1.0, %v498
    %v500 = vmul.f32 %v497, %v499
    %v501 = vadd.f32 %v497, %v500
    %vm502 = vweird.f32 %v391
    %vm503 = vweird.f32 %v497
    %vm504 = vmor %vm502, %vm503
    %v505 = vsel %vm504, %v497, %v501
    %v506 = vand.u32 2147483647, %v391
    %vm507 = vcmp.eq.f32.partialorder %v506, 8.507059e+37
    %v508 = vand.u32 %v391, 2147483648
    %v509 = vor.u32 1.1754944e-38, %v508
    %v510 = vsel %vm507, %v509, %v505
    %v511 = vmul.f32 1.0, %v510
    %v512 = vpack.c.bf16 %v406, %v406
    %v513 = vpack.c.bf16 %v421, %v421
    %v514 = vpack.c.bf16 %v436, %v436
    %v515 = vpack.c.bf16 %v451, %v451
    %v516 = vpack.c.bf16 %v466, %v466
    %v517 = vpack.c.bf16 %v481, %v481
    %v518 = vpack.c.bf16 %v496, %v496
    %v519 = vpack.c.bf16 %v511, %v511
    %v520 = vld [vmem:[#allocation8] sm:$0xff]
    %v521 = vld [vmem:[#allocation8 + $0x8] sm:$0xff]
    %v522 = vld [vmem:[#allocation8 + $0x10] sm:$0xff]
    %v523 = vld [vmem:[#allocation8 + $0x18] sm:$0xff]
    %v524 = vld [vmem:[#allocation8 + $0x20] sm:$0xff]
    %v525 = vld [vmem:[#allocation8 + $0x28] sm:$0xff]
    %v526 = vld [vmem:[#allocation8 + $0x30] sm:$0xff]
    %v527 = vld [vmem:[#allocation8 + $0x38] sm:$0xff]
    %v528 = vld [vmem:[#allocation8 + $0x40] sm:$0xff]
    %v529 = vld [vmem:[#allocation8 + $0x48] sm:$0xff]
    %v530 = vld [vmem:[#allocation8 + $0x50] sm:$0xff]
    %v531 = vld [vmem:[#allocation8 + $0x58] sm:$0xff]
    %v532 = vld [vmem:[#allocation8 + $0x60] sm:$0xff]
    %v533 = vld [vmem:[#allocation8 + $0x68] sm:$0xff]
    %v534 = vld [vmem:[#allocation8 + $0x70] sm:$0xff]
    %v535 = vld [vmem:[#allocation8 + $0x78] sm:$0xff]
    %v536 = vld [vmem:[#allocation8 + $0x80] sm:$0xff]
    %v537 = vld [vmem:[#allocation8 + $0x88] sm:$0xff]
    %v538 = vld [vmem:[#allocation8 + $0x90] sm:$0xff]
    %v539 = vld [vmem:[#allocation8 + $0x98] sm:$0xff]
    %v540 = vld [vmem:[#allocation8 + $0xa0] sm:$0xff]
    %v541 = vld [vmem:[#allocation8 + $0xa8] sm:$0xff]
    %v542 = vld [vmem:[#allocation8 + $0xb0] sm:$0xff]
    %v543 = vld [vmem:[#allocation8 + $0xb8] sm:$0xff]
    %v544 = vld [vmem:[#allocation8 + $0xc0] sm:$0xff]
    %v545 = vld [vmem:[#allocation8 + $0xc8] sm:$0xff]
    %v546 = vld [vmem:[#allocation8 + $0xd0] sm:$0xff]
    %v547 = vld [vmem:[#allocation8 + $0xd8] sm:$0xff]
    %v548 = vld [vmem:[#allocation8 + $0xe0] sm:$0xff]
    %v549 = vld [vmem:[#allocation8 + $0xe8] sm:$0xff]
    %v550 = vld [vmem:[#allocation8 + $0xf0] sm:$0xff]
    %v551 = vld [vmem:[#allocation8 + $0xf8] sm:$0xff]
    %v552 = vld [vmem:[#allocation8 + $0x100] sm:$0xff]
    %v553 = vld [vmem:[#allocation8 + $0x108] sm:$0xff]
    %v554 = vld [vmem:[#allocation8 + $0x110] sm:$0xff]
    %v555 = vld [vmem:[#allocation8 + $0x118] sm:$0xff]
    %v556 = vld [vmem:[#allocation8 + $0x120] sm:$0xff]
    %v557 = vld [vmem:[#allocation8 + $0x128] sm:$0xff]
    %v558 = vld [vmem:[#allocation8 + $0x130] sm:$0xff]
    %v559 = vld [vmem:[#allocation8 + $0x138] sm:$0xff]
    %v560 = vld [vmem:[#allocation8 + $0x140] sm:$0xff]
    %v561 = vld [vmem:[#allocation8 + $0x148] sm:$0xff]
    %v562 = vld [vmem:[#allocation8 + $0x150] sm:$0xff]
    %v563 = vld [vmem:[#allocation8 + $0x158] sm:$0xff]
    %v564 = vld [vmem:[#allocation8 + $0x160] sm:$0xff]
    %v565 = vld [vmem:[#allocation8 + $0x168] sm:$0xff]
    %v566 = vld [vmem:[#allocation8 + $0x170] sm:$0xff]
    %v567 = vld [vmem:[#allocation8 + $0x178] sm:$0xff]
    %v568 = vld [vmem:[#allocation8 + $0x180] sm:$0xff]
    %v569 = vld [vmem:[#allocation8 + $0x188] sm:$0xff]
    %v570 = vld [vmem:[#allocation8 + $0x190] sm:$0xff]
    %v571 = vld [vmem:[#allocation8 + $0x198] sm:$0xff]
    %v572 = vld [vmem:[#allocation8 + $0x1a0] sm:$0xff]
    %v573 = vld [vmem:[#allocation8 + $0x1a8] sm:$0xff]
    %v574 = vld [vmem:[#allocation8 + $0x1b0] sm:$0xff]
    %v575 = vld [vmem:[#allocation8 + $0x1b8] sm:$0xff]
    %v576 = vld [vmem:[#allocation8 + $0x1c0] sm:$0xff]
    %v577 = vld [vmem:[#allocation8 + $0x1c8] sm:$0xff]
    %v578 = vld [vmem:[#allocation8 + $0x1d0] sm:$0xff]
    %v579 = vld [vmem:[#allocation8 + $0x1d8] sm:$0xff]
    %v580 = vld [vmem:[#allocation8 + $0x1e0] sm:$0xff]
    %v581 = vld [vmem:[#allocation8 + $0x1e8] sm:$0xff]
    %v582 = vld [vmem:[#allocation8 + $0x1f0] sm:$0xff]
    %v583 = vld [vmem:[#allocation8 + $0x1f8] sm:$0xff]
    %v584 = vld [vmem:[#allocation8 + $0x200] sm:$0xff]
    %v585 = vld [vmem:[#allocation8 + $0x208] sm:$0xff]
    %v586 = vld [vmem:[#allocation8 + $0x210] sm:$0xff]
    %v587 = vld [vmem:[#allocation8 + $0x218] sm:$0xff]
    %v588 = vld [vmem:[#allocation8 + $0x220] sm:$0xff]
    %v589 = vld [vmem:[#allocation8 + $0x228] sm:$0xff]
    %v590 = vld [vmem:[#allocation8 + $0x230] sm:$0xff]
    %v591 = vld [vmem:[#allocation8 + $0x238] sm:$0xff]
    %v592 = vld [vmem:[#allocation8 + $0x240] sm:$0xff]
    %v593 = vld [vmem:[#allocation8 + $0x248] sm:$0xff]
    %v594 = vld [vmem:[#allocation8 + $0x250] sm:$0xff]
    %v595 = vld [vmem:[#allocation8 + $0x258] sm:$0xff]
    %v596 = vld [vmem:[#allocation8 + $0x260] sm:$0xff]
    %v597 = vld [vmem:[#allocation8 + $0x268] sm:$0xff]
    %v598 = vld [vmem:[#allocation8 + $0x270] sm:$0xff]
    %v599 = vld [vmem:[#allocation8 + $0x278] sm:$0xff]
    %v600 = vld [vmem:[#allocation8 + $0x280] sm:$0xff]
    %v601 = vld [vmem:[#allocation8 + $0x288] sm:$0xff]
    %v602 = vld [vmem:[#allocation8 + $0x290] sm:$0xff]
    %v603 = vld [vmem:[#allocation8 + $0x298] sm:$0xff]
    %v604 = vld [vmem:[#allocation8 + $0x2a0] sm:$0xff]
    %v605 = vld [vmem:[#allocation8 + $0x2a8] sm:$0xff]
    %v606 = vld [vmem:[#allocation8 + $0x2b0] sm:$0xff]
    %v607 = vld [vmem:[#allocation8 + $0x2b8] sm:$0xff]
    %v608 = vld [vmem:[#allocation8 + $0x2c0] sm:$0xff]
    %v609 = vld [vmem:[#allocation8 + $0x2c8] sm:$0xff]
    %v610 = vld [vmem:[#allocation8 + $0x2d0] sm:$0xff]
    %v611 = vld [vmem:[#allocation8 + $0x2d8] sm:$0xff]
    %v612 = vld [vmem:[#allocation8 + $0x2e0] sm:$0xff]
    %v613 = vld [vmem:[#allocation8 + $0x2e8] sm:$0xff]
    %v614 = vld [vmem:[#allocation8 + $0x2f0] sm:$0xff]
    %v615 = vld [vmem:[#allocation8 + $0x2f8] sm:$0xff]
    %v616 = vld [vmem:[#allocation8 + $0x300] sm:$0xff]
    %v617 = vld [vmem:[#allocation8 + $0x308] sm:$0xff]
    %v618 = vld [vmem:[#allocation8 + $0x310] sm:$0xff]
    %v619 = vld [vmem:[#allocation8 + $0x318] sm:$0xff]
    %v620 = vld [vmem:[#allocation8 + $0x320] sm:$0xff]
    %v621 = vld [vmem:[#allocation8 + $0x328] sm:$0xff]
    %v622 = vld [vmem:[#allocation8 + $0x330] sm:$0xff]
    %v623 = vld [vmem:[#allocation8 + $0x338] sm:$0xff]
    %v624 = vld [vmem:[#allocation8 + $0x340] sm:$0xff]
    %v625 = vld [vmem:[#allocation8 + $0x348] sm:$0xff]
    %v626 = vld [vmem:[#allocation8 + $0x350] sm:$0xff]
    %v627 = vld [vmem:[#allocation8 + $0x358] sm:$0xff]
    %v628 = vld [vmem:[#allocation8 + $0x360] sm:$0xff]
    %v629 = vld [vmem:[#allocation8 + $0x368] sm:$0xff]
    %v630 = vld [vmem:[#allocation8 + $0x370] sm:$0xff]
    %v631 = vld [vmem:[#allocation8 + $0x378] sm:$0xff]
    %v632 = vld [vmem:[#allocation8 + $0x380] sm:$0xff]
    %v633 = vld [vmem:[#allocation8 + $0x388] sm:$0xff]
    %v634 = vld [vmem:[#allocation8 + $0x390] sm:$0xff]
    %v635 = vld [vmem:[#allocation8 + $0x398] sm:$0xff]
    %v636 = vld [vmem:[#allocation8 + $0x3a0] sm:$0xff]
    %v637 = vld [vmem:[#allocation8 + $0x3a8] sm:$0xff]
    %v638 = vld [vmem:[#allocation8 + $0x3b0] sm:$0xff]
    %v639 = vld [vmem:[#allocation8 + $0x3b8] sm:$0xff]
    %v640 = vld [vmem:[#allocation8 + $0x3c0] sm:$0xff]
    %v641 = vld [vmem:[#allocation8 + $0x3c8] sm:$0xff]
    %v642 = vld [vmem:[#allocation8 + $0x3d0] sm:$0xff]
    %v643 = vld [vmem:[#allocation8 + $0x3d8] sm:$0xff]
    %v644 = vld [vmem:[#allocation8 + $0x3e0] sm:$0xff]
    %v645 = vld [vmem:[#allocation8 + $0x3e8] sm:$0xff]
    %v646 = vld [vmem:[#allocation8 + $0x3f0] sm:$0xff]
    %v647 = vld [vmem:[#allocation8 + $0x3f8] sm:$0xff]
    %v648 = vld [vmem:[#allocation8 + $0x400] sm:$0xff]
    %v649 = vld [vmem:[#allocation8 + $0x408] sm:$0xff]
    %v650 = vld [vmem:[#allocation8 + $0x410] sm:$0xff]
    %v651 = vld [vmem:[#allocation8 + $0x418] sm:$0xff]
    %v652 = vld [vmem:[#allocation8 + $0x420] sm:$0xff]
    %v653 = vld [vmem:[#allocation8 + $0x428] sm:$0xff]
    %v654 = vld [vmem:[#allocation8 + $0x430] sm:$0xff]
    %v655 = vld [vmem:[#allocation8 + $0x438] sm:$0xff]
    %v656 = vld [vmem:[#allocation8 + $0x440] sm:$0xff]
    %v657 = vld [vmem:[#allocation8 + $0x448] sm:$0xff]
    %v658 = vld [vmem:[#allocation8 + $0x450] sm:$0xff]
    %v659 = vld [vmem:[#allocation8 + $0x458] sm:$0xff]
    %v660 = vld [vmem:[#allocation8 + $0x460] sm:$0xff]
    %v661 = vld [vmem:[#allocation8 + $0x468] sm:$0xff]
    %v662 = vld [vmem:[#allocation8 + $0x470] sm:$0xff]
    %v663 = vld [vmem:[#allocation8 + $0x478] sm:$0xff]
    %v664 = vld [vmem:[#allocation8 + $0x480] sm:$0xff]
    %v665 = vld [vmem:[#allocation8 + $0x488] sm:$0xff]
    %v666 = vld [vmem:[#allocation8 + $0x490] sm:$0xff]
    %v667 = vld [vmem:[#allocation8 + $0x498] sm:$0xff]
    %v668 = vld [vmem:[#allocation8 + $0x4a0] sm:$0xff]
    %v669 = vld [vmem:[#allocation8 + $0x4a8] sm:$0xff]
    %v670 = vld [vmem:[#allocation8 + $0x4b0] sm:$0xff]
    %v671 = vld [vmem:[#allocation8 + $0x4b8] sm:$0xff]
    %v672 = vld [vmem:[#allocation8 + $0x4c0] sm:$0xff]
    %v673 = vld [vmem:[#allocation8 + $0x4c8] sm:$0xff]
    %v674 = vld [vmem:[#allocation8 + $0x4d0] sm:$0xff]
    %v675 = vld [vmem:[#allocation8 + $0x4d8] sm:$0xff]
    %v676 = vld [vmem:[#allocation8 + $0x4e0] sm:$0xff]
    %v677 = vld [vmem:[#allocation8 + $0x4e8] sm:$0xff]
    %v678 = vld [vmem:[#allocation8 + $0x4f0] sm:$0xff]
    %v679 = vld [vmem:[#allocation8 + $0x4f8] sm:$0xff]
    %v680 = vld [vmem:[#allocation8 + $0x500] sm:$0xff]
    %v681 = vld [vmem:[#allocation8 + $0x508] sm:$0xff]
    %v682 = vld [vmem:[#allocation8 + $0x510] sm:$0xff]
    %v683 = vld [vmem:[#allocation8 + $0x518] sm:$0xff]
    %v684 = vld [vmem:[#allocation8 + $0x520] sm:$0xff]
    %v685 = vld [vmem:[#allocation8 + $0x528] sm:$0xff]
    %v686 = vld [vmem:[#allocation8 + $0x530] sm:$0xff]
    %v687 = vld [vmem:[#allocation8 + $0x538] sm:$0xff]
    %v688 = vld [vmem:[#allocation8 + $0x540] sm:$0xff]
    %v689 = vld [vmem:[#allocation8 + $0x548] sm:$0xff]
    %v690 = vld [vmem:[#allocation8 + $0x550] sm:$0xff]
    %v691 = vld [vmem:[#allocation8 + $0x558] sm:$0xff]
    %v692 = vld [vmem:[#allocation8 + $0x560] sm:$0xff]
    %v693 = vld [vmem:[#allocation8 + $0x568] sm:$0xff]
    %v694 = vld [vmem:[#allocation8 + $0x570] sm:$0xff]
    %v695 = vld [vmem:[#allocation8 + $0x578] sm:$0xff]
    %v696 = vld [vmem:[#allocation8 + $0x580] sm:$0xff]
    %v697 = vld [vmem:[#allocation8 + $0x588] sm:$0xff]
    %v698 = vld [vmem:[#allocation8 + $0x590] sm:$0xff]
    %v699 = vld [vmem:[#allocation8 + $0x598] sm:$0xff]
    %v700 = vld [vmem:[#allocation8 + $0x5a0] sm:$0xff]
    %v701 = vld [vmem:[#allocation8 + $0x5a8] sm:$0xff]
    %v702 = vld [vmem:[#allocation8 + $0x5b0] sm:$0xff]
    %v703 = vld [vmem:[#allocation8 + $0x5b8] sm:$0xff]
    %v704 = vld [vmem:[#allocation8 + $0x5c0] sm:$0xff]
    %v705 = vld [vmem:[#allocation8 + $0x5c8] sm:$0xff]
    %v706 = vld [vmem:[#allocation8 + $0x5d0] sm:$0xff]
    %v707 = vld [vmem:[#allocation8 + $0x5d8] sm:$0xff]
    %v708 = vld [vmem:[#allocation8 + $0x5e0] sm:$0xff]
    %v709 = vld [vmem:[#allocation8 + $0x5e8] sm:$0xff]
    %v710 = vld [vmem:[#allocation8 + $0x5f0] sm:$0xff]
    %v711 = vld [vmem:[#allocation8 + $0x5f8] sm:$0xff]
    %v712 = vld [vmem:[#allocation8 + $0x600] sm:$0xff]
    %v713 = vld [vmem:[#allocation8 + $0x608] sm:$0xff]
    %v714 = vld [vmem:[#allocation8 + $0x610] sm:$0xff]
    %v715 = vld [vmem:[#allocation8 + $0x618] sm:$0xff]
    %v716 = vld [vmem:[#allocation8 + $0x620] sm:$0xff]
    %v717 = vld [vmem:[#allocation8 + $0x628] sm:$0xff]
    %v718 = vld [vmem:[#allocation8 + $0x630] sm:$0xff]
    %v719 = vld [vmem:[#allocation8 + $0x638] sm:$0xff]
    %v720 = vld [vmem:[#allocation8 + $0x640] sm:$0xff]
    %v721 = vld [vmem:[#allocation8 + $0x648] sm:$0xff]
    %v722 = vld [vmem:[#allocation8 + $0x650] sm:$0xff]
    %v723 = vld [vmem:[#allocation8 + $0x658] sm:$0xff]
    %v724 = vld [vmem:[#allocation8 + $0x660] sm:$0xff]
    %v725 = vld [vmem:[#allocation8 + $0x668] sm:$0xff]
    %v726 = vld [vmem:[#allocation8 + $0x670] sm:$0xff]
    %v727 = vld [vmem:[#allocation8 + $0x678] sm:$0xff]
    %v728 = vld [vmem:[#allocation8 + $0x680] sm:$0xff]
    %v729 = vld [vmem:[#allocation8 + $0x688] sm:$0xff]
    %v730 = vld [vmem:[#allocation8 + $0x690] sm:$0xff]
    %v731 = vld [vmem:[#allocation8 + $0x698] sm:$0xff]
    %v732 = vld [vmem:[#allocation8 + $0x6a0] sm:$0xff]
    %v733 = vld [vmem:[#allocation8 + $0x6a8] sm:$0xff]
    %v734 = vld [vmem:[#allocation8 + $0x6b0] sm:$0xff]
    %v735 = vld [vmem:[#allocation8 + $0x6b8] sm:$0xff]
    %v736 = vld [vmem:[#allocation8 + $0x6c0] sm:$0xff]
    %v737 = vld [vmem:[#allocation8 + $0x6c8] sm:$0xff]
    %v738 = vld [vmem:[#allocation8 + $0x6d0] sm:$0xff]
    %v739 = vld [vmem:[#allocation8 + $0x6d8] sm:$0xff]
    %v740 = vld [vmem:[#allocation8 + $0x6e0] sm:$0xff]
    %v741 = vld [vmem:[#allocation8 + $0x6e8] sm:$0xff]
    %v742 = vld [vmem:[#allocation8 + $0x6f0] sm:$0xff]
    %v743 = vld [vmem:[#allocation8 + $0x6f8] sm:$0xff]
    %v744 = vld [vmem:[#allocation8 + $0x700] sm:$0xff]
    %v745 = vld [vmem:[#allocation8 + $0x708] sm:$0xff]
    %v746 = vld [vmem:[#allocation8 + $0x710] sm:$0xff]
    %v747 = vld [vmem:[#allocation8 + $0x718] sm:$0xff]
    %v748 = vld [vmem:[#allocation8 + $0x720] sm:$0xff]
    %v749 = vld [vmem:[#allocation8 + $0x728] sm:$0xff]
    %v750 = vld [vmem:[#allocation8 + $0x730] sm:$0xff]
    %v751 = vld [vmem:[#allocation8 + $0x738] sm:$0xff]
    %v752 = vld [vmem:[#allocation8 + $0x740] sm:$0xff]
    %v753 = vld [vmem:[#allocation8 + $0x748] sm:$0xff]
    %v754 = vld [vmem:[#allocation8 + $0x750] sm:$0xff]
    %v755 = vld [vmem:[#allocation8 + $0x758] sm:$0xff]
    %v756 = vld [vmem:[#allocation8 + $0x760] sm:$0xff]
    %v757 = vld [vmem:[#allocation8 + $0x768] sm:$0xff]
    %v758 = vld [vmem:[#allocation8 + $0x770] sm:$0xff]
    %v759 = vld [vmem:[#allocation8 + $0x778] sm:$0xff]
    %v760 = vld [vmem:[#allocation8 + $0x780] sm:$0xff]
    %v761 = vld [vmem:[#allocation8 + $0x788] sm:$0xff]
    %v762 = vld [vmem:[#allocation8 + $0x790] sm:$0xff]
    %v763 = vld [vmem:[#allocation8 + $0x798] sm:$0xff]
    %v764 = vld [vmem:[#allocation8 + $0x7a0] sm:$0xff]
    %v765 = vld [vmem:[#allocation8 + $0x7a8] sm:$0xff]
    %v766 = vld [vmem:[#allocation8 + $0x7b0] sm:$0xff]
    %v767 = vld [vmem:[#allocation8 + $0x7b8] sm:$0xff]
    %v768 = vld [vmem:[#allocation8 + $0x7c0] sm:$0xff]
    %v769 = vld [vmem:[#allocation8 + $0x7c8] sm:$0xff]
    %v770 = vld [vmem:[#allocation8 + $0x7d0] sm:$0xff]
    %v771 = vld [vmem:[#allocation8 + $0x7d8] sm:$0xff]
    %v772 = vld [vmem:[#allocation8 + $0x7e0] sm:$0xff]
    %v773 = vld [vmem:[#allocation8 + $0x7e8] sm:$0xff]
    %v774 = vld [vmem:[#allocation8 + $0x7f0] sm:$0xff]
    %v775 = vld [vmem:[#allocation8 + $0x7f8] sm:$0xff]
    %v776 = vld [vmem:[#allocation10] sm:$0xf]
    %v778 = vperm.slane %v776, 0
    %v779 = vperm.slane %v776, 1
    %v780 = vperm.slane %v776, 2
    %v781 = vperm.slane %v776, 3
    %v1042 = vunpack.c.l.b16 %v520
    %v1043 = vunpack.c.h.b16 %v520
    %v1044 = vunpack.c.l.b16 %v521
    %v1045 = vunpack.c.h.b16 %v521
    %v1046 = vunpack.c.l.b16 %v522
    %v1047 = vunpack.c.h.b16 %v522
    %v1048 = vunpack.c.l.b16 %v523
    %v1049 = vunpack.c.h.b16 %v523
    %v1050 = vunpack.c.l.b16 %v524
    %v1051 = vunpack.c.h.b16 %v524
    %v1052 = vunpack.c.l.b16 %v525
    %v1053 = vunpack.c.h.b16 %v525
    %v1054 = vunpack.c.l.b16 %v526
    %v1055 = vunpack.c.h.b16 %v526
    %v1056 = vunpack.c.l.b16 %v527
    %v1057 = vunpack.c.h.b16 %v527
    %v1058 = vunpack.c.l.b16 %v528
    %v1059 = vunpack.c.h.b16 %v528
    %v1060 = vunpack.c.l.b16 %v529
    %v1061 = vunpack.c.h.b16 %v529
    %v1062 = vunpack.c.l.b16 %v530
    %v1063 = vunpack.c.h.b16 %v530
    %v1064 = vunpack.c.l.b16 %v531
    %v1065 = vunpack.c.h.b16 %v531
    %v1066 = vunpack.c.l.b16 %v532
    %v1067 = vunpack.c.h.b16 %v532
    %v1068 = vunpack.c.l.b16 %v533
    %v1069 = vunpack.c.h.b16 %v533
    %v1070 = vunpack.c.l.b16 %v534
    %v1071 = vunpack.c.h.b16 %v534
    %v1072 = vunpack.c.l.b16 %v535
    %v1073 = vunpack.c.h.b16 %v535
    %v1074 = vunpack.c.l.b16 %v536
    %v1075 = vunpack.c.h.b16 %v536
    %v1076 = vunpack.c.l.b16 %v537
    %v1077 = vunpack.c.h.b16 %v537
    %v1078 = vunpack.c.l.b16 %v538
    %v1079 = vunpack.c.h.b16 %v538
    %v1080 = vunpack.c.l.b16 %v539
    %v1081 = vunpack.c.h.b16 %v539
    %v1082 = vunpack.c.l.b16 %v540
    %v1083 = vunpack.c.h.b16 %v540
    %v1084 = vunpack.c.l.b16 %v541
    %v1085 = vunpack.c.h.b16 %v541
    %v1086 = vunpack.c.l.b16 %v542
    %v1087 = vunpack.c.h.b16 %v542
    %v1088 = vunpack.c.l.b16 %v543
    %v1089 = vunpack.c.h.b16 %v543
    %v1090 = vunpack.c.l.b16 %v544
    %v1091 = vunpack.c.h.b16 %v544
    %v1092 = vunpack.c.l.b16 %v545
    %v1093 = vunpack.c.h.b16 %v545
    %v1094 = vunpack.c.l.b16 %v546
    %v1095 = vunpack.c.h.b16 %v546
    %v1096 = vunpack.c.l.b16 %v547
    %v1097 = vunpack.c.h.b16 %v547
    %v1098 = vunpack.c.l.b16 %v548
    %v1099 = vunpack.c.h.b16 %v548
    %v1100 = vunpack.c.l.b16 %v549
    %v1101 = vunpack.c.h.b16 %v549
    %v1102 = vunpack.c.l.b16 %v550
    %v1103 = vunpack.c.h.b16 %v550
    %v1104 = vunpack.c.l.b16 %v551
    %v1105 = vunpack.c.h.b16 %v551
    %v1106 = vunpack.c.l.b16 %v552
    %v1107 = vunpack.c.h.b16 %v552
    %v1108 = vunpack.c.l.b16 %v553
    %v1109 = vunpack.c.h.b16 %v553
    %v1110 = vunpack.c.l.b16 %v554
    %v1111 = vunpack.c.h.b16 %v554
    %v1112 = vunpack.c.l.b16 %v555
    %v1113 = vunpack.c.h.b16 %v555
    %v1114 = vunpack.c.l.b16 %v556
    %v1115 = vunpack.c.h.b16 %v556
    %v1116 = vunpack.c.l.b16 %v557
    %v1117 = vunpack.c.h.b16 %v557
    %v1118 = vunpack.c.l.b16 %v558
    %v1119 = vunpack.c.h.b16 %v558
    %v1120 = vunpack.c.l.b16 %v559
    %v1121 = vunpack.c.h.b16 %v559
    %v1122 = vunpack.c.l.b16 %v560
    %v1123 = vunpack.c.h.b16 %v560
    %v1124 = vunpack.c.l.b16 %v561
    %v1125 = vunpack.c.h.b16 %v561
    %v1126 = vunpack.c.l.b16 %v562
    %v1127 = vunpack.c.h.b16 %v562
    %v1128 = vunpack.c.l.b16 %v563
    %v1129 = vunpack.c.h.b16 %v563
    %v1130 = vunpack.c.l.b16 %v564
    %v1131 = vunpack.c.h.b16 %v564
    %v1132 = vunpack.c.l.b16 %v565
    %v1133 = vunpack.c.h.b16 %v565
    %v1134 = vunpack.c.l.b16 %v566
    %v1135 = vunpack.c.h.b16 %v566
    %v1136 = vunpack.c.l.b16 %v567
    %v1137 = vunpack.c.h.b16 %v567
    %v1138 = vunpack.c.l.b16 %v568
    %v1139 = vunpack.c.h.b16 %v568
    %v1140 = vunpack.c.l.b16 %v569
    %v1141 = vunpack.c.h.b16 %v569
    %v1142 = vunpack.c.l.b16 %v570
    %v1143 = vunpack.c.h.b16 %v570
    %v1144 = vunpack.c.l.b16 %v571
    %v1145 = vunpack.c.h.b16 %v571
    %v1146 = vunpack.c.l.b16 %v572
    %v1147 = vunpack.c.h.b16 %v572
    %v1148 = vunpack.c.l.b16 %v573
    %v1149 = vunpack.c.h.b16 %v573
    %v1150 = vunpack.c.l.b16 %v574
    %v1151 = vunpack.c.h.b16 %v574
    %v1152 = vunpack.c.l.b16 %v575
    %v1153 = vunpack.c.h.b16 %v575
    %v1154 = vunpack.c.l.b16 %v576
    %v1155 = vunpack.c.h.b16 %v576
    %v1156 = vunpack.c.l.b16 %v577
    %v1157 = vunpack.c.h.b16 %v577
    %v1158 = vunpack.c.l.b16 %v578
    %v1159 = vunpack.c.h.b16 %v578
    %v1160 = vunpack.c.l.b16 %v579
    %v1161 = vunpack.c.h.b16 %v579
    %v1162 = vunpack.c.l.b16 %v580
    %v1163 = vunpack.c.h.b16 %v580
    %v1164 = vunpack.c.l.b16 %v581
    %v1165 = vunpack.c.h.b16 %v581
    %v1166 = vunpack.c.l.b16 %v582
    %v1167 = vunpack.c.h.b16 %v582
    %v1168 = vunpack.c.l.b16 %v583
    %v1169 = vunpack.c.h.b16 %v583
    %v1170 = vunpack.c.l.b16 %v584
    %v1171 = vunpack.c.h.b16 %v584
    %v1172 = vunpack.c.l.b16 %v585
    %v1173 = vunpack.c.h.b16 %v585
    %v1174 = vunpack.c.l.b16 %v586
    %v1175 = vunpack.c.h.b16 %v586
    %v1176 = vunpack.c.l.b16 %v587
    %v1177 = vunpack.c.h.b16 %v587
    %v1178 = vunpack.c.l.b16 %v588
    %v1179 = vunpack.c.h.b16 %v588
    %v1180 = vunpack.c.l.b16 %v589
    %v1181 = vunpack.c.h.b16 %v589
    %v1182 = vunpack.c.l.b16 %v590
    %v1183 = vunpack.c.h.b16 %v590
    %v1184 = vunpack.c.l.b16 %v591
    %v1185 = vunpack.c.h.b16 %v591
    %v1186 = vunpack.c.l.b16 %v592
    %v1187 = vunpack.c.h.b16 %v592
    %v1188 = vunpack.c.l.b16 %v593
    %v1189 = vunpack.c.h.b16 %v593
    %v1190 = vunpack.c.l.b16 %v594
    %v1191 = vunpack.c.h.b16 %v594
    %v1192 = vunpack.c.l.b16 %v595
    %v1193 = vunpack.c.h.b16 %v595
    %v1194 = vunpack.c.l.b16 %v596
    %v1195 = vunpack.c.h.b16 %v596
    %v1196 = vunpack.c.l.b16 %v597
    %v1197 = vunpack.c.h.b16 %v597
    %v1198 = vunpack.c.l.b16 %v598
    %v1199 = vunpack.c.h.b16 %v598
    %v1200 = vunpack.c.l.b16 %v599
    %v1201 = vunpack.c.h.b16 %v599
    %v1202 = vunpack.c.l.b16 %v600
    %v1203 = vunpack.c.h.b16 %v600
    %v1204 = vunpack.c.l.b16 %v601
    %v1205 = vunpack.c.h.b16 %v601
    %v1206 = vunpack.c.l.b16 %v602
    %v1207 = vunpack.c.h.b16 %v602
    %v1208 = vunpack.c.l.b16 %v603
    %v1209 = vunpack.c.h.b16 %v603
    %v1210 = vunpack.c.l.b16 %v604
    %v1211 = vunpack.c.h.b16 %v604
    %v1212 = vunpack.c.l.b16 %v605
    %v1213 = vunpack.c.h.b16 %v605
    %v1214 = vunpack.c.l.b16 %v606
    %v1215 = vunpack.c.h.b16 %v606
    %v1216 = vunpack.c.l.b16 %v607
    %v1217 = vunpack.c.h.b16 %v607
    %v1218 = vunpack.c.l.b16 %v608
    %v1219 = vunpack.c.h.b16 %v608
    %v1220 = vunpack.c.l.b16 %v609
    %v1221 = vunpack.c.h.b16 %v609
    %v1222 = vunpack.c.l.b16 %v610
    %v1223 = vunpack.c.h.b16 %v610
    %v1224 = vunpack.c.l.b16 %v611
    %v1225 = vunpack.c.h.b16 %v611
    %v1226 = vunpack.c.l.b16 %v612
    %v1227 = vunpack.c.h.b16 %v612
    %v1228 = vunpack.c.l.b16 %v613
    %v1229 = vunpack.c.h.b16 %v613
    %v1230 = vunpack.c.l.b16 %v614
    %v1231 = vunpack.c.h.b16 %v614
    %v1232 = vunpack.c.l.b16 %v615
    %v1233 = vunpack.c.h.b16 %v615
    %v1234 = vunpack.c.l.b16 %v616
    %v1235 = vunpack.c.h.b16 %v616
    %v1236 = vunpack.c.l.b16 %v617
    %v1237 = vunpack.c.h.b16 %v617
    %v1238 = vunpack.c.l.b16 %v618
    %v1239 = vunpack.c.h.b16 %v618
    %v1240 = vunpack.c.l.b16 %v619
    %v1241 = vunpack.c.h.b16 %v619
    %v1242 = vunpack.c.l.b16 %v620
    %v1243 = vunpack.c.h.b16 %v620
    %v1244 = vunpack.c.l.b16 %v621
    %v1245 = vunpack.c.h.b16 %v621
    %v1246 = vunpack.c.l.b16 %v622
    %v1247 = vunpack.c.h.b16 %v622
    %v1248 = vunpack.c.l.b16 %v623
    %v1249 = vunpack.c.h.b16 %v623
    %v1250 = vunpack.c.l.b16 %v624
    %v1251 = vunpack.c.h.b16 %v624
    %v1252 = vunpack.c.l.b16 %v625
    %v1253 = vunpack.c.h.b16 %v625
    %v1254 = vunpack.c.l.b16 %v626
    %v1255 = vunpack.c.h.b16 %v626
    %v1256 = vunpack.c.l.b16 %v627
    %v1257 = vunpack.c.h.b16 %v627
    %v1258 = vunpack.c.l.b16 %v628
    %v1259 = vunpack.c.h.b16 %v628
    %v1260 = vunpack.c.l.b16 %v629
    %v1261 = vunpack.c.h.b16 %v629
    %v1262 = vunpack.c.l.b16 %v630
    %v1263 = vunpack.c.h.b16 %v630
    %v1264 = vunpack.c.l.b16 %v631
    %v1265 = vunpack.c.h.b16 %v631
    %v1266 = vunpack.c.l.b16 %v632
    %v1267 = vunpack.c.h.b16 %v632
    %v1268 = vunpack.c.l.b16 %v633
    %v1269 = vunpack.c.h.b16 %v633
    %v1270 = vunpack.c.l.b16 %v634
    %v1271 = vunpack.c.h.b16 %v634
    %v1272 = vunpack.c.l.b16 %v635
    %v1273 = vunpack.c.h.b16 %v635
    %v1274 = vunpack.c.l.b16 %v636
    %v1275 = vunpack.c.h.b16 %v636
    %v1276 = vunpack.c.l.b16 %v637
    %v1277 = vunpack.c.h.b16 %v637
    %v1278 = vunpack.c.l.b16 %v638
    %v1279 = vunpack.c.h.b16 %v638
    %v1280 = vunpack.c.l.b16 %v639
    %v1281 = vunpack.c.h.b16 %v639
    %v1282 = vunpack.c.l.b16 %v640
    %v1283 = vunpack.c.h.b16 %v640
    %v1284 = vunpack.c.l.b16 %v641
    %v1285 = vunpack.c.h.b16 %v641
    %v1286 = vunpack.c.l.b16 %v642
    %v1287 = vunpack.c.h.b16 %v642
    %v1288 = vunpack.c.l.b16 %v643
    %v1289 = vunpack.c.h.b16 %v643
    %v1290 = vunpack.c.l.b16 %v644
    %v1291 = vunpack.c.h.b16 %v644
    %v1292 = vunpack.c.l.b16 %v645
    %v1293 = vunpack.c.h.b16 %v645
    %v1294 = vunpack.c.l.b16 %v646
    %v1295 = vunpack.c.h.b16 %v646
    %v1296 = vunpack.c.l.b16 %v647
    %v1297 = vunpack.c.h.b16 %v647
    %v1298 = vunpack.c.l.b16 %v648
    %v1299 = vunpack.c.h.b16 %v648
    %v1300 = vunpack.c.l.b16 %v649
    %v1301 = vunpack.c.h.b16 %v649
    %v1302 = vunpack.c.l.b16 %v650
    %v1303 = vunpack.c.h.b16 %v650
    %v1304 = vunpack.c.l.b16 %v651
    %v1305 = vunpack.c.h.b16 %v651
    %v1306 = vunpack.c.l.b16 %v652
    %v1307 = vunpack.c.h.b16 %v652
    %v1308 = vunpack.c.l.b16 %v653
    %v1309 = vunpack.c.h.b16 %v653
    %v1310 = vunpack.c.l.b16 %v654
    %v1311 = vunpack.c.h.b16 %v654
    %v1312 = vunpack.c.l.b16 %v655
    %v1313 = vunpack.c.h.b16 %v655
    %v1314 = vunpack.c.l.b16 %v656
    %v1315 = vunpack.c.h.b16 %v656
    %v1316 = vunpack.c.l.b16 %v657
    %v1317 = vunpack.c.h.b16 %v657
    %v1318 = vunpack.c.l.b16 %v658
    %v1319 = vunpack.c.h.b16 %v658
    %v1320 = vunpack.c.l.b16 %v659
    %v1321 = vunpack.c.h.b16 %v659
    %v1322 = vunpack.c.l.b16 %v660
    %v1323 = vunpack.c.h.b16 %v660
    %v1324 = vunpack.c.l.b16 %v661
    %v1325 = vunpack.c.h.b16 %v661
    %v1326 = vunpack.c.l.b16 %v662
    %v1327 = vunpack.c.h.b16 %v662
    %v1328 = vunpack.c.l.b16 %v663
    %v1329 = vunpack.c.h.b16 %v663
    %v1330 = vunpack.c.l.b16 %v664
    %v1331 = vunpack.c.h.b16 %v664
    %v1332 = vunpack.c.l.b16 %v665
    %v1333 = vunpack.c.h.b16 %v665
    %v1334 = vunpack.c.l.b16 %v666
    %v1335 = vunpack.c.h.b16 %v666
    %v1336 = vunpack.c.l.b16 %v667
    %v1337 = vunpack.c.h.b16 %v667
    %v1338 = vunpack.c.l.b16 %v668
    %v1339 = vunpack.c.h.b16 %v668
    %v1340 = vunpack.c.l.b16 %v669
    %v1341 = vunpack.c.h.b16 %v669
    %v1342 = vunpack.c.l.b16 %v670
    %v1343 = vunpack.c.h.b16 %v670
    %v1344 = vunpack.c.l.b16 %v671
    %v1345 = vunpack.c.h.b16 %v671
    %v1346 = vunpack.c.l.b16 %v672
    %v1347 = vunpack.c.h.b16 %v672
    %v1348 = vunpack.c.l.b16 %v673
    %v1349 = vunpack.c.h.b16 %v673
    %v1350 = vunpack.c.l.b16 %v674
    %v1351 = vunpack.c.h.b16 %v674
    %v1352 = vunpack.c.l.b16 %v675
    %v1353 = vunpack.c.h.b16 %v675
    %v1354 = vunpack.c.l.b16 %v676
    %v1355 = vunpack.c.h.b16 %v676
    %v1356 = vunpack.c.l.b16 %v677
    %v1357 = vunpack.c.h.b16 %v677
    %v1358 = vunpack.c.l.b16 %v678
    %v1359 = vunpack.c.h.b16 %v678
    %v1360 = vunpack.c.l.b16 %v679
    %v1361 = vunpack.c.h.b16 %v679
    %v1362 = vunpack.c.l.b16 %v680
    %v1363 = vunpack.c.h.b16 %v680
    %v1364 = vunpack.c.l.b16 %v681
    %v1365 = vunpack.c.h.b16 %v681
    %v1366 = vunpack.c.l.b16 %v682
    %v1367 = vunpack.c.h.b16 %v682
    %v1368 = vunpack.c.l.b16 %v683
    %v1369 = vunpack.c.h.b16 %v683
    %v1370 = vunpack.c.l.b16 %v684
    %v1371 = vunpack.c.h.b16 %v684
    %v1372 = vunpack.c.l.b16 %v685
    %v1373 = vunpack.c.h.b16 %v685
    %v1374 = vunpack.c.l.b16 %v686
    %v1375 = vunpack.c.h.b16 %v686
    %v1376 = vunpack.c.l.b16 %v687
    %v1377 = vunpack.c.h.b16 %v687
    %v1378 = vunpack.c.l.b16 %v688
    %v1379 = vunpack.c.h.b16 %v688
    %v1380 = vunpack.c.l.b16 %v689
    %v1381 = vunpack.c.h.b16 %v689
    %v1382 = vunpack.c.l.b16 %v690
    %v1383 = vunpack.c.h.b16 %v690
    %v1384 = vunpack.c.l.b16 %v691
    %v1385 = vunpack.c.h.b16 %v691
    %v1386 = vunpack.c.l.b16 %v692
    %v1387 = vunpack.c.h.b16 %v692
    %v1388 = vunpack.c.l.b16 %v693
    %v1389 = vunpack.c.h.b16 %v693
    %v1390 = vunpack.c.l.b16 %v694
    %v1391 = vunpack.c.h.b16 %v694
    %v1392 = vunpack.c.l.b16 %v695
    %v1393 = vunpack.c.h.b16 %v695
    %v1394 = vunpack.c.l.b16 %v696
    %v1395 = vunpack.c.h.b16 %v696
    %v1396 = vunpack.c.l.b16 %v697
    %v1397 = vunpack.c.h.b16 %v697
    %v1398 = vunpack.c.l.b16 %v698
    %v1399 = vunpack.c.h.b16 %v698
    %v1400 = vunpack.c.l.b16 %v699
    %v1401 = vunpack.c.h.b16 %v699
    %v1402 = vunpack.c.l.b16 %v700
    %v1403 = vunpack.c.h.b16 %v700
    %v1404 = vunpack.c.l.b16 %v701
    %v1405 = vunpack.c.h.b16 %v701
    %v1406 = vunpack.c.l.b16 %v702
    %v1407 = vunpack.c.h.b16 %v702
    %v1408 = vunpack.c.l.b16 %v703
    %v1409 = vunpack.c.h.b16 %v703
    %v1410 = vunpack.c.l.b16 %v704
    %v1411 = vunpack.c.h.b16 %v704
    %v1412 = vunpack.c.l.b16 %v705
    %v1413 = vunpack.c.h.b16 %v705
    %v1414 = vunpack.c.l.b16 %v706
    %v1415 = vunpack.c.h.b16 %v706
    %v1416 = vunpack.c.l.b16 %v707
    %v1417 = vunpack.c.h.b16 %v707
    %v1418 = vunpack.c.l.b16 %v708
    %v1419 = vunpack.c.h.b16 %v708
    %v1420 = vunpack.c.l.b16 %v709
    %v1421 = vunpack.c.h.b16 %v709
    %v1422 = vunpack.c.l.b16 %v710
    %v1423 = vunpack.c.h.b16 %v710
    %v1424 = vunpack.c.l.b16 %v711
    %v1425 = vunpack.c.h.b16 %v711
    %v1426 = vunpack.c.l.b16 %v712
    %v1427 = vunpack.c.h.b16 %v712
    %v1428 = vunpack.c.l.b16 %v713
    %v1429 = vunpack.c.h.b16 %v713
    %v1430 = vunpack.c.l.b16 %v714
    %v1431 = vunpack.c.h.b16 %v714
    %v1432 = vunpack.c.l.b16 %v715
    %v1433 = vunpack.c.h.b16 %v715
    %v1434 = vunpack.c.l.b16 %v716
    %v1435 = vunpack.c.h.b16 %v716
    %v1436 = vunpack.c.l.b16 %v717
    %v1437 = vunpack.c.h.b16 %v717
    %v1438 = vunpack.c.l.b16 %v718
    %v1439 = vunpack.c.h.b16 %v718
    %v1440 = vunpack.c.l.b16 %v719
    %v1441 = vunpack.c.h.b16 %v719
    %v1442 = vunpack.c.l.b16 %v720
    %v1443 = vunpack.c.h.b16 %v720
    %v1444 = vunpack.c.l.b16 %v721
    %v1445 = vunpack.c.h.b16 %v721
    %v1446 = vunpack.c.l.b16 %v722
    %v1447 = vunpack.c.h.b16 %v722
    %v1448 = vunpack.c.l.b16 %v723
    %v1449 = vunpack.c.h.b16 %v723
    %v1450 = vunpack.c.l.b16 %v724
    %v1451 = vunpack.c.h.b16 %v724
    %v1452 = vunpack.c.l.b16 %v725
    %v1453 = vunpack.c.h.b16 %v725
    %v1454 = vunpack.c.l.b16 %v726
    %v1455 = vunpack.c.h.b16 %v726
    %v1456 = vunpack.c.l.b16 %v727
    %v1457 = vunpack.c.h.b16 %v727
    %v1458 = vunpack.c.l.b16 %v728
    %v1459 = vunpack.c.h.b16 %v728
    %v1460 = vunpack.c.l.b16 %v729
    %v1461 = vunpack.c.h.b16 %v729
    %v1462 = vunpack.c.l.b16 %v730
    %v1463 = vunpack.c.h.b16 %v730
    %v1464 = vunpack.c.l.b16 %v731
    %v1465 = vunpack.c.h.b16 %v731
    %v1466 = vunpack.c.l.b16 %v732
    %v1467 = vunpack.c.h.b16 %v732
    %v1468 = vunpack.c.l.b16 %v733
    %v1469 = vunpack.c.h.b16 %v733
    %v1470 = vunpack.c.l.b16 %v734
    %v1471 = vunpack.c.h.b16 %v734
    %v1472 = vunpack.c.l.b16 %v735
    %v1473 = vunpack.c.h.b16 %v735
    %v1474 = vunpack.c.l.b16 %v736
    %v1475 = vunpack.c.h.b16 %v736
    %v1476 = vunpack.c.l.b16 %v737
    %v1477 = vunpack.c.h.b16 %v737
    %v1478 = vunpack.c.l.b16 %v738
    %v1479 = vunpack.c.h.b16 %v738
    %v1480 = vunpack.c.l.b16 %v739
    %v1481 = vunpack.c.h.b16 %v739
    %v1482 = vunpack.c.l.b16 %v740
    %v1483 = vunpack.c.h.b16 %v740
    %v1484 = vunpack.c.l.b16 %v741
    %v1485 = vunpack.c.h.b16 %v741
    %v1486 = vunpack.c.l.b16 %v742
    %v1487 = vunpack.c.h.b16 %v742
    %v1488 = vunpack.c.l.b16 %v743
    %v1489 = vunpack.c.h.b16 %v743
    %v1490 = vunpack.c.l.b16 %v744
    %v1491 = vunpack.c.h.b16 %v744
    %v1492 = vunpack.c.l.b16 %v745
    %v1493 = vunpack.c.h.b16 %v745
    %v1494 = vunpack.c.l.b16 %v746
    %v1495 = vunpack.c.h.b16 %v746
    %v1496 = vunpack.c.l.b16 %v747
    %v1497 = vunpack.c.h.b16 %v747
    %v1498 = vunpack.c.l.b16 %v748
    %v1499 = vunpack.c.h.b16 %v748
    %v1500 = vunpack.c.l.b16 %v749
    %v1501 = vunpack.c.h.b16 %v749
    %v1502 = vunpack.c.l.b16 %v750
    %v1503 = vunpack.c.h.b16 %v750
    %v1504 = vunpack.c.l.b16 %v751
    %v1505 = vunpack.c.h.b16 %v751
    %v1506 = vunpack.c.l.b16 %v752
    %v1507 = vunpack.c.h.b16 %v752
    %v1508 = vunpack.c.l.b16 %v753
    %v1509 = vunpack.c.h.b16 %v753
    %v1510 = vunpack.c.l.b16 %v754
    %v1511 = vunpack.c.h.b16 %v754
    %v1512 = vunpack.c.l.b16 %v755
    %v1513 = vunpack.c.h.b16 %v755
    %v1514 = vunpack.c.l.b16 %v756
    %v1515 = vunpack.c.h.b16 %v756
    %v1516 = vunpack.c.l.b16 %v757
    %v1517 = vunpack.c.h.b16 %v757
    %v1518 = vunpack.c.l.b16 %v758
    %v1519 = vunpack.c.h.b16 %v758
    %v1520 = vunpack.c.l.b16 %v759
    %v1521 = vunpack.c.h.b16 %v759
    %v1522 = vunpack.c.l.b16 %v760
    %v1523 = vunpack.c.h.b16 %v760
    %v1524 = vunpack.c.l.b16 %v761
    %v1525 = vunpack.c.h.b16 %v761
    %v1526 = vunpack.c.l.b16 %v762
    %v1527 = vunpack.c.h.b16 %v762
    %v1528 = vunpack.c.l.b16 %v763
    %v1529 = vunpack.c.h.b16 %v763
    %v1530 = vunpack.c.l.b16 %v764
    %v1531 = vunpack.c.h.b16 %v764
    %v1532 = vunpack.c.l.b16 %v765
    %v1533 = vunpack.c.h.b16 %v765
    %v1534 = vunpack.c.l.b16 %v766
    %v1535 = vunpack.c.h.b16 %v766
    %v1536 = vunpack.c.l.b16 %v767
    %v1537 = vunpack.c.h.b16 %v767
    %v1538 = vunpack.c.l.b16 %v768
    %v1539 = vunpack.c.h.b16 %v768
    %v1540 = vunpack.c.l.b16 %v769
    %v1541 = vunpack.c.h.b16 %v769
    %v1542 = vunpack.c.l.b16 %v770
    %v1543 = vunpack.c.h.b16 %v770
    %v1544 = vunpack.c.l.b16 %v771
    %v1545 = vunpack.c.h.b16 %v771
    %v1546 = vunpack.c.l.b16 %v772
    %v1547 = vunpack.c.h.b16 %v772
    %v1548 = vunpack.c.l.b16 %v773
    %v1549 = vunpack.c.h.b16 %v773
    %v1550 = vunpack.c.l.b16 %v774
    %v1551 = vunpack.c.h.b16 %v774
    %v1552 = vunpack.c.l.b16 %v775
    %v1553 = vunpack.c.h.b16 %v775
    %v1554 = vpack.c.b16 %v1046, %v1042
    %v1555 = vpack.c.b16 %v1047, %v1043
    %v1556 = vpack.c.b16 %v1048, %v1044
    %v1557 = vpack.c.b16 %v1049, %v1045
    %v1558 = vpack.c.b16 %v1054, %v1050
    %v1559 = vpack.c.b16 %v1055, %v1051
    %v1560 = vpack.c.b16 %v1056, %v1052
    %v1561 = vpack.c.b16 %v1057, %v1053
    %v1562 = vpack.c.b16 %v1062, %v1058
    %v1563 = vpack.c.b16 %v1063, %v1059
    %v1564 = vpack.c.b16 %v1064, %v1060
    %v1565 = vpack.c.b16 %v1065, %v1061
    %v1566 = vpack.c.b16 %v1070, %v1066
    %v1567 = vpack.c.b16 %v1071, %v1067
    %v1568 = vpack.c.b16 %v1072, %v1068
    %v1569 = vpack.c.b16 %v1073, %v1069
    %v1570 = vpack.c.b16 %v1078, %v1074
    %v1571 = vpack.c.b16 %v1079, %v1075
    %v1572 = vpack.c.b16 %v1080, %v1076
    %v1573 = vpack.c.b16 %v1081, %v1077
    %v1574 = vpack.c.b16 %v1086, %v1082
    %v1575 = vpack.c.b16 %v1087, %v1083
    %v1576 = vpack.c.b16 %v1088, %v1084
    %v1577 = vpack.c.b16 %v1089, %v1085
    %v1578 = vpack.c.b16 %v1094, %v1090
    %v1579 = vpack.c.b16 %v1095, %v1091
    %v1580 = vpack.c.b16 %v1096, %v1092
    %v1581 = vpack.c.b16 %v1097, %v1093
    %v1582 = vpack.c.b16 %v1102, %v1098
    %v1583 = vpack.c.b16 %v1103, %v1099
    %v1584 = vpack.c.b16 %v1104, %v1100
    %v1585 = vpack.c.b16 %v1105, %v1101
    %v1586 = vpack.c.b16 %v1110, %v1106
    %v1587 = vpack.c.b16 %v1111, %v1107
    %v1588 = vpack.c.b16 %v1112, %v1108
    %v1589 = vpack.c.b16 %v1113, %v1109
    %v1590 = vpack.c.b16 %v1118, %v1114
    %v1591 = vpack.c.b16 %v1119, %v1115
    %v1592 = vpack.c.b16 %v1120, %v1116
    %v1593 = vpack.c.b16 %v1121, %v1117
    %v1594 = vpack.c.b16 %v1126, %v1122
    %v1595 = vpack.c.b16 %v1127, %v1123
    %v1596 = vpack.c.b16 %v1128, %v1124
    %v1597 = vpack.c.b16 %v1129, %v1125
    %v1598 = vpack.c.b16 %v1134, %v1130
    %v1599 = vpack.c.b16 %v1135, %v1131
    %v1600 = vpack.c.b16 %v1136, %v1132
    %v1601 = vpack.c.b16 %v1137, %v1133
    %v1602 = vpack.c.b16 %v1142, %v1138
    %v1603 = vpack.c.b16 %v1143, %v1139
    %v1604 = vpack.c.b16 %v1144, %v1140
    %v1605 = vpack.c.b16 %v1145, %v1141
    %v1606 = vpack.c.b16 %v1150, %v1146
    %v1607 = vpack.c.b16 %v1151, %v1147
    %v1608 = vpack.c.b16 %v1152, %v1148
    %v1609 = vpack.c.b16 %v1153, %v1149
    %v1610 = vpack.c.b16 %v1158, %v1154
    %v1611 = vpack.c.b16 %v1159, %v1155
    %v1612 = vpack.c.b16 %v1160, %v1156
    %v1613 = vpack.c.b16 %v1161, %v1157
    %v1614 = vpack.c.b16 %v1166, %v1162
    %v1615 = vpack.c.b16 %v1167, %v1163
    %v1616 = vpack.c.b16 %v1168, %v1164
    %v1617 = vpack.c.b16 %v1169, %v1165
    %v1618 = vpack.c.b16 %v1174, %v1170
    %v1619 = vpack.c.b16 %v1175, %v1171
    %v1620 = vpack.c.b16 %v1176, %v1172
    %v1621 = vpack.c.b16 %v1177, %v1173
    %v1622 = vpack.c.b16 %v1182, %v1178
    %v1623 = vpack.c.b16 %v1183, %v1179
    %v1624 = vpack.c.b16 %v1184, %v1180
    %v1625 = vpack.c.b16 %v1185, %v1181
    %v1626 = vpack.c.b16 %v1190, %v1186
    %v1627 = vpack.c.b16 %v1191, %v1187
    %v1628 = vpack.c.b16 %v1192, %v1188
    %v1629 = vpack.c.b16 %v1193, %v1189
    %v1630 = vpack.c.b16 %v1198, %v1194
    %v1631 = vpack.c.b16 %v1199, %v1195
    %v1632 = vpack.c.b16 %v1200, %v1196
    %v1633 = vpack.c.b16 %v1201, %v1197
    %v1634 = vpack.c.b16 %v1206, %v1202
    %v1635 = vpack.c.b16 %v1207, %v1203
    %v1636 = vpack.c.b16 %v1208, %v1204
    %v1637 = vpack.c.b16 %v1209, %v1205
    %v1638 = vpack.c.b16 %v1214, %v1210
    %v1639 = vpack.c.b16 %v1215, %v1211
    %v1640 = vpack.c.b16 %v1216, %v1212
    %v1641 = vpack.c.b16 %v1217, %v1213
    %v1642 = vpack.c.b16 %v1222, %v1218
    %v1643 = vpack.c.b16 %v1223, %v1219
    %v1644 = vpack.c.b16 %v1224, %v1220
    %v1645 = vpack.c.b16 %v1225, %v1221
    %v1646 = vpack.c.b16 %v1230, %v1226
    %v1647 = vpack.c.b16 %v1231, %v1227
    %v1648 = vpack.c.b16 %v1232, %v1228
    %v1649 = vpack.c.b16 %v1233, %v1229
    %v1650 = vpack.c.b16 %v1238, %v1234
    %v1651 = vpack.c.b16 %v1239, %v1235
    %v1652 = vpack.c.b16 %v1240, %v1236
    %v1653 = vpack.c.b16 %v1241, %v1237
    %v1654 = vpack.c.b16 %v1246, %v1242
    %v1655 = vpack.c.b16 %v1247, %v1243
    %v1656 = vpack.c.b16 %v1248, %v1244
    %v1657 = vpack.c.b16 %v1249, %v1245
    %v1658 = vpack.c.b16 %v1254, %v1250
    %v1659 = vpack.c.b16 %v1255, %v1251
    %v1660 = vpack.c.b16 %v1256, %v1252
    %v1661 = vpack.c.b16 %v1257, %v1253
    %v1662 = vpack.c.b16 %v1262, %v1258
    %v1663 = vpack.c.b16 %v1263, %v1259
    %v1664 = vpack.c.b16 %v1264, %v1260
    %v1665 = vpack.c.b16 %v1265, %v1261
    %v1666 = vpack.c.b16 %v1270, %v1266
    %v1667 = vpack.c.b16 %v1271, %v1267
    %v1668 = vpack.c.b16 %v1272, %v1268
    %v1669 = vpack.c.b16 %v1273, %v1269
    %v1670 = vpack.c.b16 %v1278, %v1274
    %v1671 = vpack.c.b16 %v1279, %v1275
    %v1672 = vpack.c.b16 %v1280, %v1276
    %v1673 = vpack.c.b16 %v1281, %v1277
    %v1674 = vpack.c.b16 %v1286, %v1282
    %v1675 = vpack.c.b16 %v1287, %v1283
    %v1676 = vpack.c.b16 %v1288, %v1284
    %v1677 = vpack.c.b16 %v1289, %v1285
    %v1678 = vpack.c.b16 %v1294, %v1290
    %v1679 = vpack.c.b16 %v1295, %v1291
    %v1680 = vpack.c.b16 %v1296, %v1292
    %v1681 = vpack.c.b16 %v1297, %v1293
    %v1682 = vpack.c.b16 %v1302, %v1298
    %v1683 = vpack.c.b16 %v1303, %v1299
    %v1684 = vpack.c.b16 %v1304, %v1300
    %v1685 = vpack.c.b16 %v1305, %v1301
    %v1686 = vpack.c.b16 %v1310, %v1306
    %v1687 = vpack.c.b16 %v1311, %v1307
    %v1688 = vpack.c.b16 %v1312, %v1308
    %v1689 = vpack.c.b16 %v1313, %v1309
    %v1690 = vpack.c.b16 %v1318, %v1314
    %v1691 = vpack.c.b16 %v1319, %v1315
    %v1692 = vpack.c.b16 %v1320, %v1316
    %v1693 = vpack.c.b16 %v1321, %v1317
    %v1694 = vpack.c.b16 %v1326, %v1322
    %v1695 = vpack.c.b16 %v1327, %v1323
    %v1696 = vpack.c.b16 %v1328, %v1324
    %v1697 = vpack.c.b16 %v1329, %v1325
    %v1698 = vpack.c.b16 %v1334, %v1330
    %v1699 = vpack.c.b16 %v1335, %v1331
    %v1700 = vpack.c.b16 %v1336, %v1332
    %v1701 = vpack.c.b16 %v1337, %v1333
    %v1702 = vpack.c.b16 %v1342, %v1338
    %v1703 = vpack.c.b16 %v1343, %v1339
    %v1704 = vpack.c.b16 %v1344, %v1340
    %v1705 = vpack.c.b16 %v1345, %v1341
    %v1706 = vpack.c.b16 %v1350, %v1346
    %v1707 = vpack.c.b16 %v1351, %v1347
    %v1708 = vpack.c.b16 %v1352, %v1348
    %v1709 = vpack.c.b16 %v1353, %v1349
    %v1710 = vpack.c.b16 %v1358, %v1354
    %v1711 = vpack.c.b16 %v1359, %v1355
    %v1712 = vpack.c.b16 %v1360, %v1356
    %v1713 = vpack.c.b16 %v1361, %v1357
    %v1714 = vpack.c.b16 %v1366, %v1362
    %v1715 = vpack.c.b16 %v1367, %v1363
    %v1716 = vpack.c.b16 %v1368, %v1364
    %v1717 = vpack.c.b16 %v1369, %v1365
    %v1718 = vpack.c.b16 %v1374, %v1370
    %v1719 = vpack.c.b16 %v1375, %v1371
    %v1720 = vpack.c.b16 %v1376, %v1372
    %v1721 = vpack.c.b16 %v1377, %v1373
    %v1722 = vpack.c.b16 %v1382, %v1378
    %v1723 = vpack.c.b16 %v1383, %v1379
    %v1724 = vpack.c.b16 %v1384, %v1380
    %v1725 = vpack.c.b16 %v1385, %v1381
    %v1726 = vpack.c.b16 %v1390, %v1386
    %v1727 = vpack.c.b16 %v1391, %v1387
    %v1728 = vpack.c.b16 %v1392, %v1388
    %v1729 = vpack.c.b16 %v1393, %v1389
    %v1730 = vpack.c.b16 %v1398, %v1394
    %v1731 = vpack.c.b16 %v1399, %v1395
    %v1732 = vpack.c.b16 %v1400, %v1396
    %v1733 = vpack.c.b16 %v1401, %v1397
    %v1734 = vpack.c.b16 %v1406, %v1402
    %v1735 = vpack.c.b16 %v1407, %v1403
    %v1736 = vpack.c.b16 %v1408, %v1404
    %v1737 = vpack.c.b16 %v1409, %v1405
    %v1738 = vpack.c.b16 %v1414, %v1410
    %v1739 = vpack.c.b16 %v1415, %v1411
    %v1740 = vpack.c.b16 %v1416, %v1412
    %v1741 = vpack.c.b16 %v1417, %v1413
    %v1742 = vpack.c.b16 %v1422, %v1418
    %v1743 = vpack.c.b16 %v1423, %v1419
    %v1744 = vpack.c.b16 %v1424, %v1420
    %v1745 = vpack.c.b16 %v1425, %v1421
    %v1746 = vpack.c.b16 %v1430, %v1426
    %v1747 = vpack.c.b16 %v1431, %v1427
    %v1748 = vpack.c.b16 %v1432, %v1428
    %v1749 = vpack.c.b16 %v1433, %v1429
    %v1750 = vpack.c.b16 %v1438, %v1434
    %v1751 = vpack.c.b16 %v1439, %v1435
    %v1752 = vpack.c.b16 %v1440, %v1436
    %v1753 = vpack.c.b16 %v1441, %v1437
    %v1754 = vpack.c.b16 %v1446, %v1442
    %v1755 = vpack.c.b16 %v1447, %v1443
    %v1756 = vpack.c.b16 %v1448, %v1444
    %v1757 = vpack.c.b16 %v1449, %v1445
    %v1758 = vpack.c.b16 %v1454, %v1450
    %v1759 = vpack.c.b16 %v1455, %v1451
    %v1760 = vpack.c.b16 %v1456, %v1452
    %v1761 = vpack.c.b16 %v1457, %v1453
    %v1762 = vpack.c.b16 %v1462, %v1458
    %v1763 = vpack.c.b16 %v1463, %v1459
    %v1764 = vpack.c.b16 %v1464, %v1460
    %v1765 = vpack.c.b16 %v1465, %v1461
    %v1766 = vpack.c.b16 %v1470, %v1466
    %v1767 = vpack.c.b16 %v1471, %v1467
    %v1768 = vpack.c.b16 %v1472, %v1468
    %v1769 = vpack.c.b16 %v1473, %v1469
    %v1770 = vpack.c.b16 %v1478, %v1474
    %v1771 = vpack.c.b16 %v1479, %v1475
    %v1772 = vpack.c.b16 %v1480, %v1476
    %v1773 = vpack.c.b16 %v1481, %v1477
    %v1774 = vpack.c.b16 %v1486, %v1482
    %v1775 = vpack.c.b16 %v1487, %v1483
    %v1776 = vpack.c.b16 %v1488, %v1484
    %v1777 = vpack.c.b16 %v1489, %v1485
    %v1778 = vpack.c.b16 %v1494, %v1490
    %v1779 = vpack.c.b16 %v1495, %v1491
    %v1780 = vpack.c.b16 %v1496, %v1492
    %v1781 = vpack.c.b16 %v1497, %v1493
    %v1782 = vpack.c.b16 %v1502, %v1498
    %v1783 = vpack.c.b16 %v1503, %v1499
    %v1784 = vpack.c.b16 %v1504, %v1500
    %v1785 = vpack.c.b16 %v1505, %v1501
    %v1786 = vpack.c.b16 %v1510, %v1506
    %v1787 = vpack.c.b16 %v1511, %v1507
    %v1788 = vpack.c.b16 %v1512, %v1508
    %v1789 = vpack.c.b16 %v1513, %v1509
    %v1790 = vpack.c.b16 %v1518, %v1514
    %v1791 = vpack.c.b16 %v1519, %v1515
    %v1792 = vpack.c.b16 %v1520, %v1516
    %v1793 = vpack.c.b16 %v1521, %v1517
    %v1794 = vpack.c.b16 %v1526, %v1522
    %v1795 = vpack.c.b16 %v1527, %v1523
    %v1796 = vpack.c.b16 %v1528, %v1524
    %v1797 = vpack.c.b16 %v1529, %v1525
    %v1798 = vpack.c.b16 %v1534, %v1530
    %v1799 = vpack.c.b16 %v1535, %v1531
    %v1800 = vpack.c.b16 %v1536, %v1532
    %v1801 = vpack.c.b16 %v1537, %v1533
    %v1802 = vpack.c.b16 %v1542, %v1538
    %v1803 = vpack.c.b16 %v1543, %v1539
    %v1804 = vpack.c.b16 %v1544, %v1540
    %v1805 = vpack.c.b16 %v1545, %v1541
    %v1806 = vpack.c.b16 %v1550, %v1546
    %v1807 = vpack.c.b16 %v1551, %v1547
    %v1808 = vpack.c.b16 %v1552, %v1548
    %v1809 = vpack.c.b16 %v1553, %v1549
    %2066 = vmatpush.bf16.msra.mxu0 %v1582
    %2067 = vmatpush.bf16.msra.mxu0 %v1578
    %2068 = vmatpush.bf16.msra.mxu0 %v1574
    %2069 = vmatpush.bf16.msra.mxu0 %v1570
    %2070 = vmatpush.bf16.msra.mxu0 %v1566
    %2071 = vmatpush.bf16.msra.mxu0 %v1562
    %2072 = vmatpush.bf16.msra.mxu0 %v1558
    %2073 = vmatpush.bf16.msra.mxu0 %v1554
    %2074 = vmatmul.bf16.gmra.mxu0 %v512
    %v2075 = vpop.f32.mrf.mxu0
    %v2076 = vadd.f32 %v778, %v2075
    %v2077 = vpop.f32.mrf.mxu0
    %2078 = vdwg.mxu0
    %2079 = vmatpush.bf16.msra.mxu0 %v1614
    %2080 = vmatpush.bf16.msra.mxu0 %v1610
    %2081 = vmatpush.bf16.msra.mxu0 %v1606
    %2082 = vmatpush.bf16.msra.mxu0 %v1602
    %2083 = vmatpush.bf16.msra.mxu0 %v1598
    %2084 = vmatpush.bf16.msra.mxu0 %v1594
    %2085 = vmatpush.bf16.msra.mxu0 %v1590
    %2086 = vmatpush.bf16.msra.mxu0 %v1586
    %2087 = vmatmul.bf16.gmra.mxu0 %v513
    %v2088 = vpop.f32.mrf.mxu0
    %v2089 = vadd.f32 %v2076, %v2088
    %v2090 = vpop.f32.mrf.mxu0
    %2091 = vdwg.mxu0
    %2092 = vmatpush.bf16.msra.mxu0 %v1646
    %2093 = vmatpush.bf16.msra.mxu0 %v1642
    %2094 = vmatpush.bf16.msra.mxu0 %v1638
    %2095 = vmatpush.bf16.msra.mxu0 %v1634
    %2096 = vmatpush.bf16.msra.mxu0 %v1630
    %2097 = vmatpush.bf16.msra.mxu0 %v1626
    %2098 = vmatpush.bf16.msra.mxu0 %v1622
    %2099 = vmatpush.bf16.msra.mxu0 %v1618
    %2100 = vmatmul.bf16.gmra.mxu0 %v514
    %v2101 = vpop.f32.mrf.mxu0
    %v2102 = vadd.f32 %v2089, %v2101
    %v2103 = vpop.f32.mrf.mxu0
    %2104 = vdwg.mxu0
    %2105 = vmatpush.bf16.msra.mxu0 %v1678
    %2106 = vmatpush.bf16.msra.mxu0 %v1674
    %2107 = vmatpush.bf16.msra.mxu0 %v1670
    %2108 = vmatpush.bf16.msra.mxu0 %v1666
    %2109 = vmatpush.bf16.msra.mxu0 %v1662
    %2110 = vmatpush.bf16.msra.mxu0 %v1658
    %2111 = vmatpush.bf16.msra.mxu0 %v1654
    %2112 = vmatpush.bf16.msra.mxu0 %v1650
    %2113 = vmatmul.bf16.gmra.mxu0 %v515
    %v2114 = vpop.f32.mrf.mxu0
    %v2115 = vadd.f32 %v2102, %v2114
    %v2116 = vpop.f32.mrf.mxu0
    %2117 = vdwg.mxu0
    %2118 = vmatpush.bf16.msra.mxu0 %v1710
    %2119 = vmatpush.bf16.msra.mxu0 %v1706
    %2120 = vmatpush.bf16.msra.mxu0 %v1702
    %2121 = vmatpush.bf16.msra.mxu0 %v1698
    %2122 = vmatpush.bf16.msra.mxu0 %v1694
    %2123 = vmatpush.bf16.msra.mxu0 %v1690
    %2124 = vmatpush.bf16.msra.mxu0 %v1686
    %2125 = vmatpush.bf16.msra.mxu0 %v1682
    %2126 = vmatmul.bf16.gmra.mxu0 %v516
    %v2127 = vpop.f32.mrf.mxu0
    %v2128 = vadd.f32 %v2115, %v2127
    %v2129 = vpop.f32.mrf.mxu0
    %2130 = vdwg.mxu0
    %2131 = vmatpush.bf16.msra.mxu0 %v1742
    %2132 = vmatpush.bf16.msra.mxu0 %v1738
    %2133 = vmatpush.bf16.msra.mxu0 %v1734
    %2134 = vmatpush.bf16.msra.mxu0 %v1730
    %2135 = vmatpush.bf16.msra.mxu0 %v1726
    %2136 = vmatpush.bf16.msra.mxu0 %v1722
    %2137 = vmatpush.bf16.msra.mxu0 %v1718
    %2138 = vmatpush.bf16.msra.mxu0 %v1714
    %2139 = vmatmul.bf16.gmra.mxu0 %v517
    %v2140 = vpop.f32.mrf.mxu0
    %v2141 = vadd.f32 %v2128, %v2140
    %v2142 = vpop.f32.mrf.mxu0
    %2143 = vdwg.mxu0
    %2144 = vmatpush.bf16.msra.mxu0 %v1774
    %2145 = vmatpush.bf16.msra.mxu0 %v1770
    %2146 = vmatpush.bf16.msra.mxu0 %v1766
    %2147 = vmatpush.bf16.msra.mxu0 %v1762
    %2148 = vmatpush.bf16.msra.mxu0 %v1758
    %2149 = vmatpush.bf16.msra.mxu0 %v1754
    %2150 = vmatpush.bf16.msra.mxu0 %v1750
    %2151 = vmatpush.bf16.msra.mxu0 %v1746
    %2152 = vmatmul.bf16.gmra.mxu0 %v518
    %v2153 = vpop.f32.mrf.mxu0
    %v2154 = vadd.f32 %v2141, %v2153
    %v2155 = vpop.f32.mrf.mxu0
    %2156 = vdwg.mxu0
    %2157 = vmatpush.bf16.msra.mxu0 %v1806
    %2158 = vmatpush.bf16.msra.mxu0 %v1802
    %2159 = vmatpush.bf16.msra.mxu0 %v1798
    %2160 = vmatpush.bf16.msra.mxu0 %v1794
    %2161 = vmatpush.bf16.msra.mxu0 %v1790
    %2162 = vmatpush.bf16.msra.mxu0 %v1786
    %2163 = vmatpush.bf16.msra.mxu0 %v1782
    %2164 = vmatpush.bf16.msra.mxu0 %v1778
    %2165 = vmatmul.bf16.gmra.mxu0 %v519
    %v2166 = vpop.f32.mrf.mxu0
    %v2167 = vadd.f32 %v2154, %v2166
    %v2168 = vpop.f32.mrf.mxu0
    %2169 = vdwg.mxu0
    %2170 = vmatpush.bf16.msra.mxu0 %v1583
    %2171 = vmatpush.bf16.msra.mxu0 %v1579
    %2172 = vmatpush.bf16.msra.mxu0 %v1575
    %2173 = vmatpush.bf16.msra.mxu0 %v1571
    %2174 = vmatpush.bf16.msra.mxu0 %v1567
    %2175 = vmatpush.bf16.msra.mxu0 %v1563
    %2176 = vmatpush.bf16.msra.mxu0 %v1559
    %2177 = vmatpush.bf16.msra.mxu0 %v1555
    %2178 = vmatmul.bf16.gmra.mxu0 %v512
    %v2179 = vpop.f32.mrf.mxu0
    %v2180 = vadd.f32 %v779, %v2179
    %v2181 = vpop.f32.mrf.mxu0
    %2182 = vdwg.mxu0
    %2183 = vmatpush.bf16.msra.mxu0 %v1615
    %2184 = vmatpush.bf16.msra.mxu0 %v1611
    %2185 = vmatpush.bf16.msra.mxu0 %v1607
    %2186 = vmatpush.bf16.msra.mxu0 %v1603
    %2187 = vmatpush.bf16.msra.mxu0 %v1599
    %2188 = vmatpush.bf16.msra.mxu0 %v1595
    %2189 = vmatpush.bf16.msra.mxu0 %v1591
    %2190 = vmatpush.bf16.msra.mxu0 %v1587
    %2191 = vmatmul.bf16.gmra.mxu0 %v513
    %v2192 = vpop.f32.mrf.mxu0
    %v2193 = vadd.f32 %v2180, %v2192
    %v2194 = vpop.f32.mrf.mxu0
    %2195 = vdwg.mxu0
    %2196 = vmatpush.bf16.msra.mxu0 %v1647
    %2197 = vmatpush.bf16.msra.mxu0 %v1643
    %2198 = vmatpush.bf16.msra.mxu0 %v1639
    %2199 = vmatpush.bf16.msra.mxu0 %v1635
    %2200 = vmatpush.bf16.msra.mxu0 %v1631
    %2201 = vmatpush.bf16.msra.mxu0 %v1627
    %2202 = vmatpush.bf16.msra.mxu0 %v1623
    %2203 = vmatpush.bf16.msra.mxu0 %v1619
    %2204 = vmatmul.bf16.gmra.mxu0 %v514
    %v2205 = vpop.f32.mrf.mxu0
    %v2206 = vadd.f32 %v2193, %v2205
    %v2207 = vpop.f32.mrf.mxu0
    %2208 = vdwg.mxu0
    %2209 = vmatpush.bf16.msra.mxu0 %v1679
    %2210 = vmatpush.bf16.msra.mxu0 %v1675
    %2211 = vmatpush.bf16.msra.mxu0 %v1671
    %2212 = vmatpush.bf16.msra.mxu0 %v1667
    %2213 = vmatpush.bf16.msra.mxu0 %v1663
    %2214 = vmatpush.bf16.msra.mxu0 %v1659
    %2215 = vmatpush.bf16.msra.mxu0 %v1655
    %2216 = vmatpush.bf16.msra.mxu0 %v1651
    %2217 = vmatmul.bf16.gmra.mxu0 %v515
    %v2218 = vpop.f32.mrf.mxu0
    %v2219 = vadd.f32 %v2206, %v2218
    %v2220 = vpop.f32.mrf.mxu0
    %2221 = vdwg.mxu0
    %2222 = vmatpush.bf16.msra.mxu0 %v1711
    %2223 = vmatpush.bf16.msra.mxu0 %v1707
    %2224 = vmatpush.bf16.msra.mxu0 %v1703
    %2225 = vmatpush.bf16.msra.mxu0 %v1699
    %2226 = vmatpush.bf16.msra.mxu0 %v1695
    %2227 = vmatpush.bf16.msra.mxu0 %v1691
    %2228 = vmatpush.bf16.msra.mxu0 %v1687
    %2229 = vmatpush.bf16.msra.mxu0 %v1683
    %2230 = vmatmul.bf16.gmra.mxu0 %v516
    %v2231 = vpop.f32.mrf.mxu0
    %v2232 = vadd.f32 %v2219, %v2231
    %v2233 = vpop.f32.mrf.mxu0
    %2234 = vdwg.mxu0
    %2235 = vmatpush.bf16.msra.mxu0 %v1743
    %2236 = vmatpush.bf16.msra.mxu0 %v1739
    %2237 = vmatpush.bf16.msra.mxu0 %v1735
    %2238 = vmatpush.bf16.msra.mxu0 %v1731
    %2239 = vmatpush.bf16.msra.mxu0 %v1727
    %2240 = vmatpush.bf16.msra.mxu0 %v1723
    %2241 = vmatpush.bf16.msra.mxu0 %v1719
    %2242 = vmatpush.bf16.msra.mxu0 %v1715
    %2243 = vmatmul.bf16.gmra.mxu0 %v517
    %v2244 = vpop.f32.mrf.mxu0
    %v2245 = vadd.f32 %v2232, %v2244
    %v2246 = vpop.f32.mrf.mxu0
    %2247 = vdwg.mxu0
    %2248 = vmatpush.bf16.msra.mxu0 %v1775
    %2249 = vmatpush.bf16.msra.mxu0 %v1771
    %2250 = vmatpush.bf16.msra.mxu0 %v1767
    %2251 = vmatpush.bf16.msra.mxu0 %v1763
    %2252 = vmatpush.bf16.msra.mxu0 %v1759
    %2253 = vmatpush.bf16.msra.mxu0 %v1755
    %2254 = vmatpush.bf16.msra.mxu0 %v1751
    %2255 = vmatpush.bf16.msra.mxu0 %v1747
    %2256 = vmatmul.bf16.gmra.mxu0 %v518
    %v2257 = vpop.f32.mrf.mxu0
    %v2258 = vadd.f32 %v2245, %v2257
    %v2259 = vpop.f32.mrf.mxu0
    %2260 = vdwg.mxu0
    %2261 = vmatpush.bf16.msra.mxu0 %v1807
    %2262 = vmatpush.bf16.msra.mxu0 %v1803
    %2263 = vmatpush.bf16.msra.mxu0 %v1799
    %2264 = vmatpush.bf16.msra.mxu0 %v1795
    %2265 = vmatpush.bf16.msra.mxu0 %v1791
    %2266 = vmatpush.bf16.msra.mxu0 %v1787
    %2267 = vmatpush.bf16.msra.mxu0 %v1783
    %2268 = vmatpush.bf16.msra.mxu0 %v1779
    %2269 = vmatmul.bf16.gmra.mxu0 %v519
    %v2270 = vpop.f32.mrf.mxu0
    %v2271 = vadd.f32 %v2258, %v2270
    %v2272 = vpop.f32.mrf.mxu0
    %2273 = vdwg.mxu0
    %2274 = vmatpush.bf16.msra.mxu0 %v1584
    %2275 = vmatpush.bf16.msra.mxu0 %v1580
    %2276 = vmatpush.bf16.msra.mxu0 %v1576
    %2277 = vmatpush.bf16.msra.mxu0 %v1572
    %2278 = vmatpush.bf16.msra.mxu0 %v1568
    %2279 = vmatpush.bf16.msra.mxu0 %v1564
    %2280 = vmatpush.bf16.msra.mxu0 %v1560
    %2281 = vmatpush.bf16.msra.mxu0 %v1556
    %2282 = vmatmul.bf16.gmra.mxu0 %v512
    %v2283 = vpop.f32.mrf.mxu0
    %v2284 = vadd.f32 %v780, %v2283
    %v2285 = vpop.f32.mrf.mxu0
    %2286 = vdwg.mxu0
    %2287 = vmatpush.bf16.msra.mxu0 %v1616
    %2288 = vmatpush.bf16.msra.mxu0 %v1612
    %2289 = vmatpush.bf16.msra.mxu0 %v1608
    %2290 = vmatpush.bf16.msra.mxu0 %v1604
    %2291 = vmatpush.bf16.msra.mxu0 %v1600
    %2292 = vmatpush.bf16.msra.mxu0 %v1596
    %2293 = vmatpush.bf16.msra.mxu0 %v1592
    %2294 = vmatpush.bf16.msra.mxu0 %v1588
    %2295 = vmatmul.bf16.gmra.mxu0 %v513
    %v2296 = vpop.f32.mrf.mxu0
    %v2297 = vadd.f32 %v2284, %v2296
    %v2298 = vpop.f32.mrf.mxu0
    %2299 = vdwg.mxu0
    %2300 = vmatpush.bf16.msra.mxu0 %v1648
    %2301 = vmatpush.bf16.msra.mxu0 %v1644
    %2302 = vmatpush.bf16.msra.mxu0 %v1640
    %2303 = vmatpush.bf16.msra.mxu0 %v1636
    %2304 = vmatpush.bf16.msra.mxu0 %v1632
    %2305 = vmatpush.bf16.msra.mxu0 %v1628
    %2306 = vmatpush.bf16.msra.mxu0 %v1624
    %2307 = vmatpush.bf16.msra.mxu0 %v1620
    %2308 = vmatmul.bf16.gmra.mxu0 %v514
    %v2309 = vpop.f32.mrf.mxu0
    %v2310 = vadd.f32 %v2297, %v2309
    %v2311 = vpop.f32.mrf.mxu0
    %2312 = vdwg.mxu0
    %2313 = vmatpush.bf16.msra.mxu0 %v1680
    %2314 = vmatpush.bf16.msra.mxu0 %v1676
    %2315 = vmatpush.bf16.msra.mxu0 %v1672
    %2316 = vmatpush.bf16.msra.mxu0 %v1668
    %2317 = vmatpush.bf16.msra.mxu0 %v1664
    %2318 = vmatpush.bf16.msra.mxu0 %v1660
    %2319 = vmatpush.bf16.msra.mxu0 %v1656
    %2320 = vmatpush.bf16.msra.mxu0 %v1652
    %2321 = vmatmul.bf16.gmra.mxu0 %v515
    %v2322 = vpop.f32.mrf.mxu0
    %v2323 = vadd.f32 %v2310, %v2322
    %v2324 = vpop.f32.mrf.mxu0
    %2325 = vdwg.mxu0
    %2326 = vmatpush.bf16.msra.mxu0 %v1712
    %2327 = vmatpush.bf16.msra.mxu0 %v1708
    %2328 = vmatpush.bf16.msra.mxu0 %v1704
    %2329 = vmatpush.bf16.msra.mxu0 %v1700
    %2330 = vmatpush.bf16.msra.mxu0 %v1696
    %2331 = vmatpush.bf16.msra.mxu0 %v1692
    %2332 = vmatpush.bf16.msra.mxu0 %v1688
    %2333 = vmatpush.bf16.msra.mxu0 %v1684
    %2334 = vmatmul.bf16.gmra.mxu0 %v516
    %v2335 = vpop.f32.mrf.mxu0
    %v2336 = vadd.f32 %v2323, %v2335
    %v2337 = vpop.f32.mrf.mxu0
    %2338 = vdwg.mxu0
    %2339 = vmatpush.bf16.msra.mxu0 %v1744
    %2340 = vmatpush.bf16.msra.mxu0 %v1740
    %2341 = vmatpush.bf16.msra.mxu0 %v1736
    %2342 = vmatpush.bf16.msra.mxu0 %v1732
    %2343 = vmatpush.bf16.msra.mxu0 %v1728
    %2344 = vmatpush.bf16.msra.mxu0 %v1724
    %2345 = vmatpush.bf16.msra.mxu0 %v1720
    %2346 = vmatpush.bf16.msra.mxu0 %v1716
    %2347 = vmatmul.bf16.gmra.mxu0 %v517
    %v2348 = vpop.f32.mrf.mxu0
    %v2349 = vadd.f32 %v2336, %v2348
    %v2350 = vpop.f32.mrf.mxu0
    %2351 = vdwg.mxu0
    %2352 = vmatpush.bf16.msra.mxu0 %v1776
    %2353 = vmatpush.bf16.msra.mxu0 %v1772
    %2354 = vmatpush.bf16.msra.mxu0 %v1768
    %2355 = vmatpush.bf16.msra.mxu0 %v1764
    %2356 = vmatpush.bf16.msra.mxu0 %v1760
    %2357 = vmatpush.bf16.msra.mxu0 %v1756
    %2358 = vmatpush.bf16.msra.mxu0 %v1752
    %2359 = vmatpush.bf16.msra.mxu0 %v1748
    %2360 = vmatmul.bf16.gmra.mxu0 %v518
    %v2361 = vpop.f32.mrf.mxu0
    %v2362 = vadd.f32 %v2349, %v2361
    %v2363 = vpop.f32.mrf.mxu0
    %2364 = vdwg.mxu0
    %2365 = vmatpush.bf16.msra.mxu0 %v1808
    %2366 = vmatpush.bf16.msra.mxu0 %v1804
    %2367 = vmatpush.bf16.msra.mxu0 %v1800
    %2368 = vmatpush.bf16.msra.mxu0 %v1796
    %2369 = vmatpush.bf16.msra.mxu0 %v1792
    %2370 = vmatpush.bf16.msra.mxu0 %v1788
    %2371 = vmatpush.bf16.msra.mxu0 %v1784
    %2372 = vmatpush.bf16.msra.mxu0 %v1780
    %2373 = vmatmul.bf16.gmra.mxu0 %v519
    %v2374 = vpop.f32.mrf.mxu0
    %v2375 = vadd.f32 %v2362, %v2374
    %v2376 = vpop.f32.mrf.mxu0
    %2377 = vdwg.mxu0
    %2378 = vmatpush.bf16.msra.mxu0 %v1585
    %2379 = vmatpush.bf16.msra.mxu0 %v1581
    %2380 = vmatpush.bf16.msra.mxu0 %v1577
    %2381 = vmatpush.bf16.msra.mxu0 %v1573
    %2382 = vmatpush.bf16.msra.mxu0 %v1569
    %2383 = vmatpush.bf16.msra.mxu0 %v1565
    %2384 = vmatpush.bf16.msra.mxu0 %v1561
    %2385 = vmatpush.bf16.msra.mxu0 %v1557
    %2386 = vmatmul.bf16.gmra.mxu0 %v512
    %v2387 = vpop.f32.mrf.mxu0
    %v2388 = vadd.f32 %v781, %v2387
    %v2389 = vpop.f32.mrf.mxu0
    %2390 = vdwg.mxu0
    %2391 = vmatpush.bf16.msra.mxu0 %v1617
    %2392 = vmatpush.bf16.msra.mxu0 %v1613
    %2393 = vmatpush.bf16.msra.mxu0 %v1609
    %2394 = vmatpush.bf16.msra.mxu0 %v1605
    %2395 = vmatpush.bf16.msra.mxu0 %v1601
    %2396 = vmatpush.bf16.msra.mxu0 %v1597
    %2397 = vmatpush.bf16.msra.mxu0 %v1593
    %2398 = vmatpush.bf16.msra.mxu0 %v1589
    %2399 = vmatmul.bf16.gmra.mxu0 %v513
    %v2400 = vpop.f32.mrf.mxu0
    %v2401 = vadd.f32 %v2388, %v2400
    %v2402 = vpop.f32.mrf.mxu0
    %2403 = vdwg.mxu0
    %2404 = vmatpush.bf16.msra.mxu0 %v1649
    %2405 = vmatpush.bf16.msra.mxu0 %v1645
    %2406 = vmatpush.bf16.msra.mxu0 %v1641
    %2407 = vmatpush.bf16.msra.mxu0 %v1637
    %2408 = vmatpush.bf16.msra.mxu0 %v1633
    %2409 = vmatpush.bf16.msra.mxu0 %v1629
    %2410 = vmatpush.bf16.msra.mxu0 %v1625
    %2411 = vmatpush.bf16.msra.mxu0 %v1621
    %2412 = vmatmul.bf16.gmra.mxu0 %v514
    %v2413 = vpop.f32.mrf.mxu0
    %v2414 = vadd.f32 %v2401, %v2413
    %v2415 = vpop.f32.mrf.mxu0
    %2416 = vdwg.mxu0
    %2417 = vmatpush.bf16.msra.mxu0 %v1681
    %2418 = vmatpush.bf16.msra.mxu0 %v1677
    %2419 = vmatpush.bf16.msra.mxu0 %v1673
    %2420 = vmatpush.bf16.msra.mxu0 %v1669
    %2421 = vmatpush.bf16.msra.mxu0 %v1665
    %2422 = vmatpush.bf16.msra.mxu0 %v1661
    %2423 = vmatpush.bf16.msra.mxu0 %v1657
    %2424 = vmatpush.bf16.msra.mxu0 %v1653
    %2425 = vmatmul.bf16.gmra.mxu0 %v515
    %v2426 = vpop.f32.mrf.mxu0
    %v2427 = vadd.f32 %v2414, %v2426
    %v2428 = vpop.f32.mrf.mxu0
    %2429 = vdwg.mxu0
    %2430 = vmatpush.bf16.msra.mxu0 %v1713
    %2431 = vmatpush.bf16.msra.mxu0 %v1709
    %2432 = vmatpush.bf16.msra.mxu0 %v1705
    %2433 = vmatpush.bf16.msra.mxu0 %v1701
    %2434 = vmatpush.bf16.msra.mxu0 %v1697
    %2435 = vmatpush.bf16.msra.mxu0 %v1693
    %2436 = vmatpush.bf16.msra.mxu0 %v1689
    %2437 = vmatpush.bf16.msra.mxu0 %v1685
    %2438 = vmatmul.bf16.gmra.mxu0 %v516
    %v2439 = vpop.f32.mrf.mxu0
    %v2440 = vadd.f32 %v2427, %v2439
    %v2441 = vpop.f32.mrf.mxu0
    %2442 = vdwg.mxu0
    %2443 = vmatpush.bf16.msra.mxu0 %v1745
    %2444 = vmatpush.bf16.msra.mxu0 %v1741
    %2445 = vmatpush.bf16.msra.mxu0 %v1737
    %2446 = vmatpush.bf16.msra.mxu0 %v1733
    %2447 = vmatpush.bf16.msra.mxu0 %v1729
    %2448 = vmatpush.bf16.msra.mxu0 %v1725
    %2449 = vmatpush.bf16.msra.mxu0 %v1721
    %2450 = vmatpush.bf16.msra.mxu0 %v1717
    %2451 = vmatmul.bf16.gmra.mxu0 %v517
    %v2452 = vpop.f32.mrf.mxu0
    %v2453 = vadd.f32 %v2440, %v2452
    %v2454 = vpop.f32.mrf.mxu0
    %2455 = vdwg.mxu0
    %2456 = vmatpush.bf16.msra.mxu0 %v1777
    %2457 = vmatpush.bf16.msra.mxu0 %v1773
    %2458 = vmatpush.bf16.msra.mxu0 %v1769
    %2459 = vmatpush.bf16.msra.mxu0 %v1765
    %2460 = vmatpush.bf16.msra.mxu0 %v1761
    %2461 = vmatpush.bf16.msra.mxu0 %v1757
    %2462 = vmatpush.bf16.msra.mxu0 %v1753
    %2463 = vmatpush.bf16.msra.mxu0 %v1749
    %2464 = vmatmul.bf16.gmra.mxu0 %v518
    %v2465 = vpop.f32.mrf.mxu0
    %v2466 = vadd.f32 %v2453, %v2465
    %v2467 = vpop.f32.mrf.mxu0
    %2468 = vdwg.mxu0
    %2469 = vmatpush.bf16.msra.mxu0 %v1809
    %2470 = vmatpush.bf16.msra.mxu0 %v1805
    %2471 = vmatpush.bf16.msra.mxu0 %v1801
    %2472 = vmatpush.bf16.msra.mxu0 %v1797
    %2473 = vmatpush.bf16.msra.mxu0 %v1793
    %2474 = vmatpush.bf16.msra.mxu0 %v1789
    %2475 = vmatpush.bf16.msra.mxu0 %v1785
    %2476 = vmatpush.bf16.msra.mxu0 %v1781
    %2477 = vmatmul.bf16.gmra.mxu0 %v519
    %v2478 = vpop.f32.mrf.mxu0
    %v2479 = vadd.f32 %v2466, %v2478
    %v2480 = vpop.f32.mrf.mxu0
    %2481 = vdwg.mxu0
    %v2482 = vxor.u32 %v2167, 2147483648
    %v2483 = vxor.u32 %v2271, 2147483648
    %v2484 = vxor.u32 %v2375, 2147483648
    %v2485 = vxor.u32 %v2479, 2147483648
    %v2486 = vmul.f32 %v2482, 1.442695
    %v2487 = vpow.pop %v2486
    %v2488 = vmul.f32 %v2483, 1.442695
    %v2489 = vpow.pop %v2488
    %v2490 = vmul.f32 %v2484, 1.442695
    %v2491 = vpow.pop %v2490
    %v2492 = vmul.f32 %v2485, 1.442695
    %v2493 = vpow.pop %v2492
    %v2494 = vadd.f32 %v2487, 1.0
    %v2495 = vadd.f32 %v2489, 1.0
    %v2496 = vadd.f32 %v2491, 1.0
    %v2497 = vadd.f32 %v2493, 1.0
    %v2498 = vrcp.pop %v2494
    %v2499 = vmul.f32 %v2494, %v2498
    %v2500 = vsub.f32 1.0, %v2499
    %v2501 = vmul.f32 %v2498, %v2500
    %v2502 = vadd.f32 %v2498, %v2501
    %vm2503 = vweird.f32 %v2494
    %vm2504 = vweird.f32 %v2498
    %vm2505 = vmor %vm2503, %vm2504
    %v2506 = vsel %vm2505, %v2498, %v2502
    %v2507 = vand.u32 2147483647, %v2494
    %vm2508 = vcmp.eq.f32.partialorder %v2507, 8.507059e+37
    %v2509 = vand.u32 %v2494, 2147483648
    %v2510 = vor.u32 1.1754944e-38, %v2509
    %v2511 = vsel %vm2508, %v2510, %v2506
    %v2512 = vmul.f32 1.0, %v2511
    %v2513 = vrcp.pop %v2495
    %v2514 = vmul.f32 %v2495, %v2513
    %v2515 = vsub.f32 1.0, %v2514
    %v2516 = vmul.f32 %v2513, %v2515
    %v2517 = vadd.f32 %v2513, %v2516
    %vm2518 = vweird.f32 %v2495
    %vm2519 = vweird.f32 %v2513
    %vm2520 = vmor %vm2518, %vm2519
    %v2521 = vsel %vm2520, %v2513, %v2517
    %v2522 = vand.u32 2147483647, %v2495
    %vm2523 = vcmp.eq.f32.partialorder %v2522, 8.507059e+37
    %v2524 = vand.u32 %v2495, 2147483648
    %v2525 = vor.u32 1.1754944e-38, %v2524
    %v2526 = vsel %vm2523, %v2525, %v2521
    %v2527 = vmul.f32 1.0, %v2526
    %v2528 = vrcp.pop %v2496
    %v2529 = vmul.f32 %v2496, %v2528
    %v2530 = vsub.f32 1.0, %v2529
    %v2531 = vmul.f32 %v2528, %v2530
    %v2532 = vadd.f32 %v2528, %v2531
    %vm2533 = vweird.f32 %v2496
    %vm2534 = vweird.f32 %v2528
    %vm2535 = vmor %vm2533, %vm2534
    %v2536 = vsel %vm2535, %v2528, %v2532
    %v2537 = vand.u32 2147483647, %v2496
    %vm2538 = vcmp.eq.f32.partialorder %v2537, 8.507059e+37
    %v2539 = vand.u32 %v2496, 2147483648
    %v2540 = vor.u32 1.1754944e-38, %v2539
    %v2541 = vsel %vm2538, %v2540, %v2536
    %v2542 = vmul.f32 1.0, %v2541
    %v2543 = vrcp.pop %v2497
    %v2544 = vmul.f32 %v2497, %v2543
    %v2545 = vsub.f32 1.0, %v2544
    %v2546 = vmul.f32 %v2543, %v2545
    %v2547 = vadd.f32 %v2543, %v2546
    %vm2548 = vweird.f32 %v2497
    %vm2549 = vweird.f32 %v2543
    %vm2550 = vmor %vm2548, %vm2549
    %v2551 = vsel %vm2550, %v2543, %v2547
    %v2552 = vand.u32 2147483647, %v2497
    %vm2553 = vcmp.eq.f32.partialorder %v2552, 8.507059e+37
    %v2554 = vand.u32 %v2497, 2147483648
    %v2555 = vor.u32 1.1754944e-38, %v2554
    %v2556 = vsel %vm2553, %v2555, %v2551
    %v2557 = vmul.f32 1.0, %v2556
    %v2558 = vpack.c.bf16 %v2512, %v2512
    %v2559 = vpack.c.bf16 %v2527, %v2527
    %v2560 = vpack.c.bf16 %v2542, %v2542
    %v2561 = vpack.c.bf16 %v2557, %v2557
    %v2562 = vld [vmem:[#allocation11] sm:$0xf]
    %v2563 = vld [vmem:[#allocation11 + $0x4] sm:$0xf]
    %v2564 = vld [vmem:[#allocation11 + $0x8] sm:$0xf]
    %v2565 = vld [vmem:[#allocation11 + $0xc] sm:$0xf]
    %v2566 = vld [vmem:[#allocation11 + $0x10] sm:$0xf]
    %v2567 = vld [vmem:[#allocation11 + $0x14] sm:$0xf]
    %v2568 = vld [vmem:[#allocation11 + $0x18] sm:$0xf]
    %v2569 = vld [vmem:[#allocation11 + $0x1c] sm:$0xf]
    %v2570 = vld [vmem:[#allocation11 + $0x20] sm:$0xf]
    %v2571 = vld [vmem:[#allocation11 + $0x24] sm:$0xf]
    %v2572 = vld [vmem:[#allocation11 + $0x28] sm:$0xf]
    %v2573 = vld [vmem:[#allocation11 + $0x2c] sm:$0xf]
    %v2574 = vld [vmem:[#allocation11 + $0x30] sm:$0xf]
    %v2575 = vld [vmem:[#allocation11 + $0x34] sm:$0xf]
    %v2576 = vld [vmem:[#allocation11 + $0x38] sm:$0xf]
    %v2577 = vld [vmem:[#allocation11 + $0x3c] sm:$0xf]
    %v2578 = vld [vmem:[#allocation11 + $0x40] sm:$0xf]
    %v2579 = vld [vmem:[#allocation11 + $0x44] sm:$0xf]
    %v2580 = vld [vmem:[#allocation11 + $0x48] sm:$0xf]
    %v2581 = vld [vmem:[#allocation11 + $0x4c] sm:$0xf]
    %v2582 = vld [vmem:[#allocation11 + $0x50] sm:$0xf]
    %v2583 = vld [vmem:[#allocation11 + $0x54] sm:$0xf]
    %v2584 = vld [vmem:[#allocation11 + $0x58] sm:$0xf]
    %v2585 = vld [vmem:[#allocation11 + $0x5c] sm:$0xf]
    %v2586 = vld [vmem:[#allocation11 + $0x60] sm:$0xf]
    %v2587 = vld [vmem:[#allocation11 + $0x64] sm:$0xf]
    %v2588 = vld [vmem:[#allocation11 + $0x68] sm:$0xf]
    %v2589 = vld [vmem:[#allocation11 + $0x6c] sm:$0xf]
    %v2590 = vld [vmem:[#allocation11 + $0x70] sm:$0xf]
    %v2591 = vld [vmem:[#allocation11 + $0x74] sm:$0xf]
    %v2592 = vld [vmem:[#allocation11 + $0x78] sm:$0xf]
    %v2593 = vld [vmem:[#allocation11 + $0x7c] sm:$0xf]
    %v2594 = vld [vmem:[#allocation11 + $0x80] sm:$0xf]
    %v2595 = vld [vmem:[#allocation11 + $0x84] sm:$0xf]
    %v2596 = vld [vmem:[#allocation11 + $0x88] sm:$0xf]
    %v2597 = vld [vmem:[#allocation11 + $0x8c] sm:$0xf]
    %v2598 = vld [vmem:[#allocation11 + $0x90] sm:$0xf]
    %v2599 = vld [vmem:[#allocation11 + $0x94] sm:$0xf]
    %v2600 = vld [vmem:[#allocation11 + $0x98] sm:$0xf]
    %v2601 = vld [vmem:[#allocation11 + $0x9c] sm:$0xf]
    %v2602 = vld [vmem:[#allocation11 + $0xa0] sm:$0xf]
    %v2603 = vld [vmem:[#allocation11 + $0xa4] sm:$0xf]
    %v2604 = vld [vmem:[#allocation11 + $0xa8] sm:$0xf]
    %v2605 = vld [vmem:[#allocation11 + $0xac] sm:$0xf]
    %v2606 = vld [vmem:[#allocation11 + $0xb0] sm:$0xf]
    %v2607 = vld [vmem:[#allocation11 + $0xb4] sm:$0xf]
    %v2608 = vld [vmem:[#allocation11 + $0xb8] sm:$0xf]
    %v2609 = vld [vmem:[#allocation11 + $0xbc] sm:$0xf]
    %v2610 = vld [vmem:[#allocation11 + $0xc0] sm:$0xf]
    %v2611 = vld [vmem:[#allocation11 + $0xc4] sm:$0xf]
    %v2612 = vld [vmem:[#allocation11 + $0xc8] sm:$0xf]
    %v2613 = vld [vmem:[#allocation11 + $0xcc] sm:$0xf]
    %v2614 = vld [vmem:[#allocation11 + $0xd0] sm:$0xf]
    %v2615 = vld [vmem:[#allocation11 + $0xd4] sm:$0xf]
    %v2616 = vld [vmem:[#allocation11 + $0xd8] sm:$0xf]
    %v2617 = vld [vmem:[#allocation11 + $0xdc] sm:$0xf]
    %v2618 = vld [vmem:[#allocation11 + $0xe0] sm:$0xf]
    %v2619 = vld [vmem:[#allocation11 + $0xe4] sm:$0xf]
    %v2620 = vld [vmem:[#allocation11 + $0xe8] sm:$0xf]
    %v2621 = vld [vmem:[#allocation11 + $0xec] sm:$0xf]
    %v2622 = vld [vmem:[#allocation11 + $0xf0] sm:$0xf]
    %v2623 = vld [vmem:[#allocation11 + $0xf4] sm:$0xf]
    %v2624 = vld [vmem:[#allocation11 + $0xf8] sm:$0xf]
    %v2625 = vld [vmem:[#allocation11 + $0xfc] sm:$0xf]
    %v2626 = vld [vmem:[%s6] sm:$0x1]
    %v2628 = vperm.slane %v2626, 0
    %v2694 = vunpack.c.l.b16 %v2562
    %v2695 = vunpack.c.l.b16 %v2563
    %v2696 = vunpack.c.l.b16 %v2564
    %v2697 = vunpack.c.l.b16 %v2565
    %v2698 = vunpack.c.l.b16 %v2566
    %v2699 = vunpack.c.l.b16 %v2567
    %v2700 = vunpack.c.l.b16 %v2568
    %v2701 = vunpack.c.l.b16 %v2569
    %v2702 = vunpack.c.l.b16 %v2570
    %v2703 = vunpack.c.l.b16 %v2571
    %v2704 = vunpack.c.l.b16 %v2572
    %v2705 = vunpack.c.l.b16 %v2573
    %v2706 = vunpack.c.l.b16 %v2574
    %v2707 = vunpack.c.l.b16 %v2575
    %v2708 = vunpack.c.l.b16 %v2576
    %v2709 = vunpack.c.l.b16 %v2577
    %v2710 = vunpack.c.l.b16 %v2578
    %v2711 = vunpack.c.l.b16 %v2579
    %v2712 = vunpack.c.l.b16 %v2580
    %v2713 = vunpack.c.l.b16 %v2581
    %v2714 = vunpack.c.l.b16 %v2582
    %v2715 = vunpack.c.l.b16 %v2583
    %v2716 = vunpack.c.l.b16 %v2584
    %v2717 = vunpack.c.l.b16 %v2585
    %v2718 = vunpack.c.l.b16 %v2586
    %v2719 = vunpack.c.l.b16 %v2587
    %v2720 = vunpack.c.l.b16 %v2588
    %v2721 = vunpack.c.l.b16 %v2589
    %v2722 = vunpack.c.l.b16 %v2590
    %v2723 = vunpack.c.l.b16 %v2591
    %v2724 = vunpack.c.l.b16 %v2592
    %v2725 = vunpack.c.l.b16 %v2593
    %v2726 = vunpack.c.l.b16 %v2594
    %v2727 = vunpack.c.l.b16 %v2595
    %v2728 = vunpack.c.l.b16 %v2596
    %v2729 = vunpack.c.l.b16 %v2597
    %v2730 = vunpack.c.l.b16 %v2598
    %v2731 = vunpack.c.l.b16 %v2599
    %v2732 = vunpack.c.l.b16 %v2600
    %v2733 = vunpack.c.l.b16 %v2601
    %v2734 = vunpack.c.l.b16 %v2602
    %v2735 = vunpack.c.l.b16 %v2603
    %v2736 = vunpack.c.l.b16 %v2604
    %v2737 = vunpack.c.l.b16 %v2605
    %v2738 = vunpack.c.l.b16 %v2606
    %v2739 = vunpack.c.l.b16 %v2607
    %v2740 = vunpack.c.l.b16 %v2608
    %v2741 = vunpack.c.l.b16 %v2609
    %v2742 = vunpack.c.l.b16 %v2610
    %v2743 = vunpack.c.l.b16 %v2611
    %v2744 = vunpack.c.l.b16 %v2612
    %v2745 = vunpack.c.l.b16 %v2613
    %v2746 = vunpack.c.l.b16 %v2614
    %v2747 = vunpack.c.l.b16 %v2615
    %v2748 = vunpack.c.l.b16 %v2616
    %v2749 = vunpack.c.l.b16 %v2617
    %v2750 = vunpack.c.l.b16 %v2618
    %v2751 = vunpack.c.l.b16 %v2619
    %v2752 = vunpack.c.l.b16 %v2620
    %v2753 = vunpack.c.l.b16 %v2621
    %v2754 = vunpack.c.l.b16 %v2622
    %v2755 = vunpack.c.l.b16 %v2623
    %v2756 = vunpack.c.l.b16 %v2624
    %v2757 = vunpack.c.l.b16 %v2625
    %v2758 = vpack.c.b16 %v2695, %v2694
    %v2759 = vpack.c.b16 %v2697, %v2696
    %v2760 = vpack.c.b16 %v2699, %v2698
    %v2761 = vpack.c.b16 %v2701, %v2700
    %v2762 = vpack.c.b16 %v2703, %v2702
    %v2763 = vpack.c.b16 %v2705, %v2704
    %v2764 = vpack.c.b16 %v2707, %v2706
    %v2765 = vpack.c.b16 %v2709, %v2708
    %v2766 = vpack.c.b16 %v2711, %v2710
    %v2767 = vpack.c.b16 %v2713, %v2712
    %v2768 = vpack.c.b16 %v2715, %v2714
    %v2769 = vpack.c.b16 %v2717, %v2716
    %v2770 = vpack.c.b16 %v2719, %v2718
    %v2771 = vpack.c.b16 %v2721, %v2720
    %v2772 = vpack.c.b16 %v2723, %v2722
    %v2773 = vpack.c.b16 %v2725, %v2724
    %v2774 = vpack.c.b16 %v2727, %v2726
    %v2775 = vpack.c.b16 %v2729, %v2728
    %v2776 = vpack.c.b16 %v2731, %v2730
    %v2777 = vpack.c.b16 %v2733, %v2732
    %v2778 = vpack.c.b16 %v2735, %v2734
    %v2779 = vpack.c.b16 %v2737, %v2736
    %v2780 = vpack.c.b16 %v2739, %v2738
    %v2781 = vpack.c.b16 %v2741, %v2740
    %v2782 = vpack.c.b16 %v2743, %v2742
    %v2783 = vpack.c.b16 %v2745, %v2744
    %v2784 = vpack.c.b16 %v2747, %v2746
    %v2785 = vpack.c.b16 %v2749, %v2748
    %v2786 = vpack.c.b16 %v2751, %v2750
    %v2787 = vpack.c.b16 %v2753, %v2752
    %v2788 = vpack.c.b16 %v2755, %v2754
    %v2789 = vpack.c.b16 %v2757, %v2756
    %2822 = vmatpush.bf16.msra.mxu0 %v2765
    %2823 = vmatpush.bf16.msra.mxu0 %v2764
    %2824 = vmatpush.bf16.msra.mxu0 %v2763
    %2825 = vmatpush.bf16.msra.mxu0 %v2762
    %2826 = vmatpush.bf16.msra.mxu0 %v2761
    %2827 = vmatpush.bf16.msra.mxu0 %v2760
    %2828 = vmatpush.bf16.msra.mxu0 %v2759
    %2829 = vmatpush.bf16.msra.mxu0 %v2758
    %2830 = vmatmul.bf16.gmra.mxu0 %v2558
    %v2831 = vpop.f32.mrf.mxu0
    %v2832 = vadd.f32 %v2628, %v2831
    %v2833 = vpop.f32.mrf.mxu0
    %2834 = vdwg.mxu0
    %2835 = vmatpush.bf16.msra.mxu0 %v2773
    %2836 = vmatpush.bf16.msra.mxu0 %v2772
    %2837 = vmatpush.bf16.msra.mxu0 %v2771
    %2838 = vmatpush.bf16.msra.mxu0 %v2770
    %2839 = vmatpush.bf16.msra.mxu0 %v2769
    %2840 = vmatpush.bf16.msra.mxu0 %v2768
    %2841 = vmatpush.bf16.msra.mxu0 %v2767
    %2842 = vmatpush.bf16.msra.mxu0 %v2766
    %2843 = vmatmul.bf16.gmra.mxu0 %v2559
    %v2844 = vpop.f32.mrf.mxu0
    %v2845 = vadd.f32 %v2832, %v2844
    %v2846 = vpop.f32.mrf.mxu0
    %2847 = vdwg.mxu0
    %2848 = vmatpush.bf16.msra.mxu0 %v2781
    %2849 = vmatpush.bf16.msra.mxu0 %v2780
    %2850 = vmatpush.bf16.msra.mxu0 %v2779
    %2851 = vmatpush.bf16.msra.mxu0 %v2778
    %2852 = vmatpush.bf16.msra.mxu0 %v2777
    %2853 = vmatpush.bf16.msra.mxu0 %v2776
    %2854 = vmatpush.bf16.msra.mxu0 %v2775
    %2855 = vmatpush.bf16.msra.mxu0 %v2774
    %2856 = vmatmul.bf16.gmra.mxu0 %v2560
    %v2857 = vpop.f32.mrf.mxu0
    %v2858 = vadd.f32 %v2845, %v2857
    %v2859 = vpop.f32.mrf.mxu0
    %2860 = vdwg.mxu0
    %2861 = vmatpush.bf16.msra.mxu0 %v2789
    %2862 = vmatpush.bf16.msra.mxu0 %v2788
    %2863 = vmatpush.bf16.msra.mxu0 %v2787
    %2864 = vmatpush.bf16.msra.mxu0 %v2786
    %2865 = vmatpush.bf16.msra.mxu0 %v2785
    %2866 = vmatpush.bf16.msra.mxu0 %v2784
    %2867 = vmatpush.bf16.msra.mxu0 %v2783
    %2868 = vmatpush.bf16.msra.mxu0 %v2782
    %2869 = vmatmul.bf16.gmra.mxu0 %v2561
    %v2870 = vpop.f32.mrf.mxu0
    %v2871 = vadd.f32 %v2858, %v2870
    %v2872 = vpop.f32.mrf.mxu0
    %2873 = vdwg.mxu0
    %v2874 = vxor.u32 %v2871, 2147483648
    %v2875 = vmul.f32 %v2874, 1.442695
    %v2876 = vpow.pop %v2875
    %v2877 = vadd.f32 %v2876, 1.0
    %v2878 = vrcp.pop %v2877
    %v2879 = vmul.f32 %v2877, %v2878
    %v2880 = vsub.f32 1.0, %v2879
    %v2881 = vmul.f32 %v2878, %v2880
    %v2882 = vadd.f32 %v2878, %v2881
    %vm2883 = vweird.f32 %v2877
    %vm2884 = vweird.f32 %v2878
    %vm2885 = vmor %vm2883, %vm2884
    %v2886 = vsel %vm2885, %v2878, %v2882
    %v2887 = vand.u32 2147483647, %v2877
    %vm2888 = vcmp.eq.f32.partialorder %v2887, 8.507059e+37
    %v2889 = vand.u32 %v2877, 2147483648
    %v2890 = vor.u32 1.1754944e-38, %v2889
    %v2891 = vsel %vm2888, %v2890, %v2886
    %v2892 = vmul.f32 1.0, %v2891
    %v2893 = vpack.c.bf16 %v2892, %v2892
    %v2894 = vld [vmem:[#allocation13] sm:$0xf]
    %v2895 = vld [vmem:[#allocation13 + $0x4] sm:$0xf]
    %v2896 = vld [vmem:[#allocation13 + $0x8] sm:$0xf]
    %v2897 = vld [vmem:[#allocation13 + $0xc] sm:$0xf]
    %v2898 = vld [vmem:[#allocation13 + $0x10] sm:$0xf]
    %v2899 = vld [vmem:[#allocation13 + $0x14] sm:$0xf]
    %v2900 = vld [vmem:[#allocation13 + $0x18] sm:$0xf]
    %v2901 = vld [vmem:[#allocation13 + $0x1c] sm:$0xf]
    %v2902 = vld [vmem:[#allocation13 + $0x20] sm:$0xf]
    %v2903 = vld [vmem:[#allocation13 + $0x24] sm:$0xf]
    %v2904 = vld [vmem:[#allocation13 + $0x28] sm:$0xf]
    %v2905 = vld [vmem:[#allocation13 + $0x2c] sm:$0xf]
    %v2906 = vld [vmem:[#allocation13 + $0x30] sm:$0xf]
    %v2907 = vld [vmem:[#allocation13 + $0x34] sm:$0xf]
    %v2908 = vld [vmem:[#allocation13 + $0x38] sm:$0xf]
    %v2909 = vld [vmem:[#allocation13 + $0x3c] sm:$0xf]
    %v2910 = vld [vmem:[%s8] sm:$0x1]
    %v2912 = vperm.slane %v2910, 0
    %v2930 = vunpack.c.l.b16 %v2894
    %v2931 = vunpack.c.l.b16 %v2895
    %v2932 = vunpack.c.l.b16 %v2896
    %v2933 = vunpack.c.l.b16 %v2897
    %v2934 = vunpack.c.l.b16 %v2898
    %v2935 = vunpack.c.l.b16 %v2899
    %v2936 = vunpack.c.l.b16 %v2900
    %v2937 = vunpack.c.l.b16 %v2901
    %v2938 = vunpack.c.l.b16 %v2902
    %v2939 = vunpack.c.l.b16 %v2903
    %v2940 = vunpack.c.l.b16 %v2904
    %v2941 = vunpack.c.l.b16 %v2905
    %v2942 = vunpack.c.l.b16 %v2906
    %v2943 = vunpack.c.l.b16 %v2907
    %v2944 = vunpack.c.l.b16 %v2908
    %v2945 = vunpack.c.l.b16 %v2909
    %v2946 = vpack.c.b16 %v2931, %v2930
    %v2947 = vpack.c.b16 %v2933, %v2932
    %v2948 = vpack.c.b16 %v2935, %v2934
    %v2949 = vpack.c.b16 %v2937, %v2936
    %v2950 = vpack.c.b16 %v2939, %v2938
    %v2951 = vpack.c.b16 %v2941, %v2940
    %v2952 = vpack.c.b16 %v2943, %v2942
    %v2953 = vpack.c.b16 %v2945, %v2944
    %2962 = vmatpush.bf16.msra.mxu0 %v2953
    %2963 = vmatpush.bf16.msra.mxu0 %v2952
    %2964 = vmatpush.bf16.msra.mxu0 %v2951
    %2965 = vmatpush.bf16.msra.mxu0 %v2950
    %2966 = vmatpush.bf16.msra.mxu0 %v2949
    %2967 = vmatpush.bf16.msra.mxu0 %v2948
    %2968 = vmatpush.bf16.msra.mxu0 %v2947
    %2969 = vmatpush.bf16.msra.mxu0 %v2946
    %2970 = vmatmul.bf16.gmra.mxu0 %v2893
    %v2971 = vpop.f32.mrf.mxu0
    %v2972 = vadd.f32 %v2912, %v2971
    %v2973 = vpop.f32.mrf.mxu0
    %2974 = vdwg.mxu0
    %v2975 = vlaneseq
    %v2976 = vand.u32 %v2975, 127
    %vm2977 = vcmp.ge.s32.totalorder %v2976, 2
    %vm2978 = vcmp.lt.s32.totalorder %v2976, 4
    %vm2979 = vmand %vm2977, %vm2978
    %v2980 = vmul.f32 %v2972, 1.442695
    %v2981 = vpow.pop %v2980
    %v2982 = vsel %vm2979, %v2981, %v2972
    %2983 = vst [vmem:[#allocation14] sm:$0xff] %v2982
    // Predicated region
    $region66: #{tpu_custom_call.1} parent=1 // pred_check
      _
    $region67: #{tpu_custom_call.1} parent=1 // pred_check_branch
      %2985 = sbr.rel (0) target = $region69
    $region68: #{tpu_custom_call.1} parent=1 // pred_region
      %2987 = vsyncadd [#allocation4], 0
      %s2989 = sshll.u32 [#allocation14], 4
      %s2990 = int_to_ptr.vmem [resolvable:$true] %s2989
      %s2991 = sshll.u32 %s9, 4
      %s2992 = int_to_ptr.hbm [resolvable:$true] %s2991
      %2994 = dma.vmem_to_hbm [thread:$0]  %s2990, 128, %s2992, [#allocation4]
    $region69: #{tpu_custom_call.1} parent=1 // pred_fallthru
      _
    // Predicated region
    $region70: #{tpu_custom_call.1} parent=1 // pred_check
      _
    $region71: #{tpu_custom_call.1} parent=1 // pred_check_branch
      %2996 = sbr.rel (0) target = $region73
    $region72: #{tpu_custom_call.1} parent=1 // pred_region
      %2998 = dma.done [#allocation4], 128
    $region73: #{tpu_custom_call.1} parent=1 // pred_fallthru
      _
    %2999 = vsyncpa [#allocation3], 1
    %3000 = vsyncpa [#allocation6], 1
    %3001 = vsyncpa [#allocation9], 1
    %3002 = vsyncpa [#allocation12], 1
    %3003 = vsyncpa [#allocation4], 1

</llo_original>
